<compile_context>
chip_gen: v7x
topology: tpu7x:2x2x1
jax: 0.10.0
libtpu: 0.0.40
codegen_flags: <defaults>
</compile_context>

<pallas_src>
import jax
import jax.numpy as jnp
import numpy as np
from jax.experimental import pallas as pl
from jax.experimental.pallas import tpu as pltpu

M = 3            # harmonic order
N_B = 8          # number of Bessel basis functions
HIDDEN_DIM = 32  # for the (unused-in-forward) self_interaction Linear
MAX_TILE = 8192  # edge columns (lanes) per grid step
MIN_TILE = 128


def _round_up(x, m):
    return ((x + m - 1) // m) * m


def _cdiv(a, b):
    return -(-a // b)


def _num_tensorcores():
    """Best-effort chip detection: only v7x has 2 TensorCores per chip."""
    try:
        kind = jax.devices()[0].device_kind.lower()
        if "v7" in kind or "tpu7" in kind:
            return 2
    except Exception:
        pass
    return 1


def _choose_tile_and_pad(n_edges, num_tc):
    """Pick the lane tile and padded edge count.

    1 TC (v5e/v6e): biggest tile <= MAX_TILE, minimizing grid steps.
    2 TC (v7x):     aim for an even step count >= 2 so megacore sharding of the
                    single "parallel" axis stays balanced.
    """
    n128 = _round_up(max(n_edges, 1), MIN_TILE)
    if num_tc <= 1:
        tile = min(MAX_TILE, n128)
    else:
        steps = max(2, _cdiv(n128, MAX_TILE))
        if steps % 2:
            steps += 1
        tile = min(MAX_TILE, _round_up(_cdiv(n128, steps), MIN_TILE))
    n_pad = _round_up(n128, tile)
    return tile, n_pad


def _silu(x):
    # Exact SiLU with a single EUP transcendental (tanh) per element.
    return 0.5 * x * (1.0 + jnp.tanh(0.5 * x))


def _circ_harm_kernel(rt_ref, bb_ref, w1_ref, b1_ref, w2_ref, b2_ref,
                      w3_ref, b3_ref, w4_ref, b4_ref, out_ref):
    r = rt_ref[0:1, :]                       # (1, T)
    theta = rt_ref[1:2, :]                   # (1, T)

    # 1/r via EUP approx reciprocal + one Newton step (full f32 accuracy).
    inv_r = pl.reciprocal(r, approx=True)
    inv_r = inv_r * (2.0 - r * inv_r)

    # Bessel radial basis: 2*sin(b*pi*r/rc)/(rc*r).
    # pi/rc is pre-folded into bb_ref, 2/rc is pre-folded into w1_ref.
    bessel = jnp.sin(bb_ref[...] * r) * inv_r                     # (N_B, T)

    # radial MLP (transposed): W^T @ X, tanh-form SiLU, f32 accumulate.
    h = _silu(jnp.dot(w1_ref[...], bessel,
                      preferred_element_type=jnp.float32) + b1_ref[...])
    h = _silu(jnp.dot(w2_ref[...], h,
                      preferred_element_type=jnp.float32) + b2_ref[...])
    h = _silu(jnp.dot(w3_ref[...], h,
                      preferred_element_type=jnp.float32) + b3_ref[...])
    # Rows of R8 are [R0, R1, R2, R3, R1, R2, R3, 0]: the duplication/padding
    # is folded into w4_ref/b4_ref in the wrapper.
    R8 = jnp.dot(w4_ref[...], h,
                 preferred_element_type=jnp.float32) + b4_ref[...]            # (8, T)

    # Circular harmonics via angle-addition recurrence: 2 transcendentals total.
    c1 = jnp.cos(theta)                                           # (1, T)
    s1 = jnp.sin(theta)                                           # (1, T)
    c2 = c1 * c1 - s1 * s1
    s2 = 2.0 * c1 * s1
    c3 = c2 * c1 - s2 * s1
    s3 = s2 * c1 + c2 * s1
    ones = jnp.ones_like(c1)
    zeros = jnp.zeros_like(c1)
    trig = jnp.concatenate([ones, c1, c2, c3, s1, s2, s3, zeros], axis=0)  # (8, T)

    # Single unmasked lane-dense (8, T) store; row 7 is zero padding (sliced
    # off in the wrapper).
    out_ref[...] = R8 * trig


def circular_harmonic_conv(pos, params):
    """pos: (B, V, 2) float32 -> (B, V, V, 2*M+1) float32."""
    B, V, _ = pos.shape
    pos = pos.astype(jnp.float32)

    delta = pos[:, :, None, :] - pos[:, None, :, :]                   # (B,V,V,2)
    r = jnp.maximum(jnp.sqrt(jnp.sum(delta * delta, axis=-1)), 1e-6)  # (B,V,V)
    rc = jnp.max(r)                                                   # scalar cutoff
    theta = jnp.arctan2(delta[..., 1], delta[..., 0] + 1e-6)          # (B,V,V)

    N = B * V * V
    tile, n_pad = _choose_tile_and_pad(N, _num_tensorcores())

    # Pack r/theta into one lane-major (2, n_pad) slab; pad with r=1, theta=0.
    rt = jnp.stack([r.reshape(N), theta.reshape(N)], axis=0)          # (2, N)
    if n_pad != N:
        pad = n_pad - N
        pad_cols = jnp.concatenate([jnp.ones((1, pad), jnp.float32),
                                    jnp.zeros((1, pad), jnp.float32)], axis=0)
        rt = jnp.concatenate([rt, pad_cols], axis=1)

    # Bessel frequencies with pi/rc folded in; 2/rc folded into W1 -> no scalar
    # rc input to the kernel at all.
    bb = jnp.cumsum(jax.nn.softplus(params["g"]))                     # (N_B,)
    bb_scaled = (bb * (jnp.pi / rc)).reshape(N_B, 1)                  # (N_B, 1)

    w1t = (params["w1"].T * (2.0 / rc)).astype(jnp.float32)           # (64, N_B)
    b1c = params["b1"].reshape(-1, 1)                                 # (64, 1)
    w2t = params["w2"].T                                              # (64, 64)
    b2c = params["b2"].reshape(-1, 1)
    w3t = params["w3"].T                                              # (64, 64)
    b3c = params["b3"].reshape(-1, 1)

    # Fold the output-row layout [R0,R1,R2,R3,R1,R2,R3,0] into the last layer so
    # the kernel's final matmul directly produces the harmonic-multiplier rows
    # and the store is one full (8, T) block.
    dup = jnp.array([0, 1, 2, 3, 1, 2, 3], dtype=jnp.int32)
    w4t = params["w4"].T                                              # (M+1, 64)
    b4t = params["b4"].reshape(-1, 1)                                 # (M+1, 1)
    w4d = jnp.zeros((8, 64), jnp.float32).at[:2 * M + 1].set(w4t[dup])
    b4d = jnp.zeros((8, 1), jnp.float32).at[:2 * M + 1].set(b4t[dup])

    out_dim = 2 * M + 1
    resident = lambda i: (0, 0)

    out_t = pl.pallas_call(
        _circ_harm_kernel,
        out_shape=jax.ShapeDtypeStruct((8, n_pad), jnp.float32),
        grid_spec=pltpu.PrefetchScalarGridSpec(
            num_scalar_prefetch=0,
            grid=(n_pad // tile,),
            in_specs=[
                pl.BlockSpec((2, tile), lambda i: (0, i)),            # [r; theta]
                pl.BlockSpec((N_B, 1), resident),                     # bessel freqs
                pl.BlockSpec((64, N_B), resident),                    # w1^T (scaled)
                pl.BlockSpec((64, 1), resident),                      # b1
                pl.BlockSpec((64, 64), resident),                     # w2^T
                pl.BlockSpec((64, 1), resident),                      # b2
                pl.BlockSpec((64, 64), resident),                     # w3^T
                pl.BlockSpec((64, 1), resident),                      # b3
                pl.BlockSpec((8, 64), resident),                      # w4^T dup/pad
                pl.BlockSpec((8, 1), resident),                       # b4 dup/pad
            ],
            out_specs=pl.BlockSpec((8, tile), lambda i: (0, i)),
        ),
        compiler_params=pltpu.CompilerParams(
            dimension_semantics=("parallel",),
            vmem_limit_bytes=32 * 1024 * 1024),
    )(rt, bb_scaled, w1t, b1c, w2t, b2c, w3t, b3c, w4d, b4d)

    # Layout plumbing back to (B, V, V, 2M+1).
    # TODO(synk): this transpose is a pure mem-bound extra HBM pass; it could
    # be removed if the downstream consumer accepted channel-major output.
    return out_t[:out_dim, :N].T.reshape(B, V, V, out_dim)


def init_params(key):
    """Deterministic init mirroring the module's __init__ shapes."""
    ks = jax.random.split(key, 8)

    def linear(k, fan_in, fan_out):
        kw, kb = jax.random.split(k)
        bound = 1.0 / np.sqrt(fan_in)
        w = jax.random.uniform(kw, (fan_in, fan_out), jnp.float32, -bound, bound)
        b = jax.random.uniform(kb, (1, fan_out), jnp.float32, -bound, bound)
        return w, b

    w1, b1 = linear(ks[0], N_B, 64)
    w2, b2 = linear(ks[1], 64, 64)
    w3, b3 = linear(ks[2], 64, 64)
    w4, b4 = linear(ks[3], 64, M + 1)
    # TODO(synk): self_interaction Linear(hidden_dim, hidden_dim) and the `graph`
    # argument are never used in forward(); parameters kept for parity only.
    w_self, b_self = linear(ks[4], HIDDEN_DIM, HIDDEN_DIM)
    g = jnp.arange(1, N_B + 1, dtype=jnp.float32)
    return dict(g=g, w1=w1, b1=b1, w2=w2, b2=b2, w3=w3, b3=b3, w4=w4, b4=b4,
                w_self=w_self, b_self=b_self)


def reference(pos, p):
    """Pure-JAX reference, line-for-line with the PyTorch forward."""
    delta = pos[:, :, None, :] - pos[:, None, :, :]
    r = jnp.maximum(jnp.linalg.norm(delta, axis=-1, keepdims=True), 1e-6)
    rc = jnp.max(r)
    b = jnp.cumsum(jax.nn.softplus(p["g"])).reshape(1, 1, 1, -1)
    bessel = 2.0 * jnp.sin(b * jnp.pi * r / rc) / (rc * r)
    h = jax.nn.silu(bessel @ p["w1"] + p["b1"][0])
    h = jax.nn.silu(h @ p["w2"] + p["b2"][0])
    h = jax.nn.silu(h @ p["w3"] + p["b3"][0])
    R = h @ p["w4"] + p["b4"][0]
    theta = jnp.arctan2(delta[..., 1:2], delta[..., 0:1] + 1e-6)
    m = jnp.arange(0, M + 1, dtype=jnp.float32).reshape(1, 1, 1, -1)
    cosm = jnp.cos(m * theta)
    sinm = jnp.sin(m * theta)
    return jnp.concatenate([R * cosm, R[..., 1:] * sinm[..., 1:]], axis=-1)


if __name__ == "__main__":
    key = jax.random.PRNGKey(0)
    kp, kx = jax.random.split(key)
    params = init_params(kp)

    B, V = 2, 16
    pos = jax.random.normal(kx, (B, V, 2), jnp.float32)

    out = circular_harmonic_conv(pos, params)
    out = jax.block_until_ready(out)
    assert out.shape == (B, V, V, 2 * M + 1)

    ref = reference(pos, params)
    np.testing.assert_allclose(np.asarray(out), np.asarray(ref),
                               rtol=2e-3, atol=2e-3)
    print("KERNEL_OK")
</pallas_src>

<mosaic_0001>
module attributes {stable_mosaic.version = 11 : i64} {
  func.func @_circ_harm_kernel(%arg0: i32, %arg1: memref<2x512xf32, #tpu.memory_space<vmem>>, %arg2: memref<8x1xf32, #tpu.memory_space<vmem>>, %arg3: memref<64x8xf32, #tpu.memory_space<vmem>>, %arg4: memref<64x1xf32, #tpu.memory_space<vmem>>, %arg5: memref<64x64xf32, #tpu.memory_space<vmem>>, %arg6: memref<64x1xf32, #tpu.memory_space<vmem>>, %arg7: memref<64x64xf32, #tpu.memory_space<vmem>>, %arg8: memref<64x1xf32, #tpu.memory_space<vmem>>, %arg9: memref<8x64xf32, #tpu.memory_space<vmem>>, %arg10: memref<8x1xf32, #tpu.memory_space<vmem>>, %arg11: memref<8x512xf32, #tpu.memory_space<vmem>>) attributes {dimension_semantics = [#tpu.dimension_semantics<parallel>], iteration_bounds = array<i64: 1>, scalar_prefetch = 0 : i64, scratch_operands = 0 : i64, tpu.core_type = #tpu.core_type<tc>, window_params = [{transform_indices = @transform_0, window_bounds = array<i64: 2, 512>}, {pipeline_mode = #tpu.pipeline_mode<synchronous>, transform_indices = @transform_1, window_bounds = array<i64: 8, 1>}, {pipeline_mode = #tpu.pipeline_mode<synchronous>, transform_indices = @transform_2, window_bounds = array<i64: 64, 8>}, {pipeline_mode = #tpu.pipeline_mode<synchronous>, transform_indices = @transform_3, window_bounds = array<i64: 64, 1>}, {pipeline_mode = #tpu.pipeline_mode<synchronous>, transform_indices = @transform_4, window_bounds = array<i64: 64, 64>}, {pipeline_mode = #tpu.pipeline_mode<synchronous>, transform_indices = @transform_5, window_bounds = array<i64: 64, 1>}, {pipeline_mode = #tpu.pipeline_mode<synchronous>, transform_indices = @transform_6, window_bounds = array<i64: 64, 64>}, {pipeline_mode = #tpu.pipeline_mode<synchronous>, transform_indices = @transform_7, window_bounds = array<i64: 64, 1>}, {pipeline_mode = #tpu.pipeline_mode<synchronous>, transform_indices = @transform_8, window_bounds = array<i64: 8, 64>}, {pipeline_mode = #tpu.pipeline_mode<synchronous>, transform_indices = @transform_9, window_bounds = array<i64: 8, 1>}, {transform_indices = @transform_10, window_bounds = array<i64: 8, 512>}]} {
    %c0 = arith.constant 0 : index
    %c0_0 = arith.constant 0 : index
    %0 = vector.load %arg1[%c0, %c0_0] : memref<2x512xf32, #tpu.memory_space<vmem>>, vector<1x512xf32>
    %c1 = arith.constant 1 : index
    %c0_1 = arith.constant 0 : index
    %1 = vector.load %arg1[%c1, %c0_1] : memref<2x512xf32, #tpu.memory_space<vmem>>, vector<1x512xf32>
    %2 = tpu.reciprocal %0 {approx = true} : vector<1x512xf32> -> vector<1x512xf32>
    %3 = arith.mulf %0, %2 : vector<1x512xf32>
    %cst = arith.constant 2.000000e+00 : f32
    %4 = vector.broadcast %cst : f32 to vector<1x512xf32>
    %5 = arith.subf %4, %3 : vector<1x512xf32>
    %6 = arith.mulf %2, %5 : vector<1x512xf32>
    %c0_2 = arith.constant 0 : index
    %c0_3 = arith.constant 0 : index
    %7 = vector.load %arg2[%c0_2, %c0_3] : memref<8x1xf32, #tpu.memory_space<vmem>>, vector<8x1xf32>
    %8 = vector.broadcast %7 : vector<8x1xf32> to vector<8x512xf32>
    %9 = vector.broadcast %0 : vector<1x512xf32> to vector<8x512xf32>
    %10 = arith.mulf %8, %9 : vector<8x512xf32>
    %11 = math.sin %10 : vector<8x512xf32>
    %12 = vector.broadcast %6 : vector<1x512xf32> to vector<8x512xf32>
    %13 = arith.mulf %11, %12 : vector<8x512xf32>
    %c0_4 = arith.constant 0 : index
    %c0_5 = arith.constant 0 : index
    %14 = vector.load %arg3[%c0_4, %c0_5] : memref<64x8xf32, #tpu.memory_space<vmem>>, vector<64x8xf32>
    %cst_6 = arith.constant dense<0.000000e+00> : vector<64x512xf32>
    %15 = tpu.matmul %14, %13, %cst_6 {dimension_numbers = #tpu.dot_dimension_numbers<[1], [0], [0], [1], [0, 0, 1, 1], [], []>} : vector<64x8xf32>, vector<8x512xf32>, vector<64x512xf32> -> vector<64x512xf32>
    %c0_7 = arith.constant 0 : index
    %c0_8 = arith.constant 0 : index
    %16 = vector.load %arg4[%c0_7, %c0_8] : memref<64x1xf32, #tpu.memory_space<vmem>>, vector<64x1xf32>
    %17 = vector.broadcast %16 : vector<64x1xf32> to vector<64x512xf32>
    %18 = arith.addf %15, %17 : vector<64x512xf32>
    %cst_9 = arith.constant 5.000000e-01 : f32
    %19 = vector.broadcast %cst_9 : f32 to vector<64x512xf32>
    %20 = arith.mulf %19, %18 : vector<64x512xf32>
    %cst_10 = arith.constant 5.000000e-01 : f32
    %21 = vector.broadcast %cst_10 : f32 to vector<64x512xf32>
    %22 = arith.mulf %21, %18 : vector<64x512xf32>
    %23 = math.tanh %22 : vector<64x512xf32>
    %cst_11 = arith.constant 1.000000e+00 : f32
    %24 = vector.broadcast %cst_11 : f32 to vector<64x512xf32>
    %25 = arith.addf %24, %23 : vector<64x512xf32>
    %26 = arith.mulf %20, %25 : vector<64x512xf32>
    %c0_12 = arith.constant 0 : index
    %c0_13 = arith.constant 0 : index
    %27 = vector.load %arg5[%c0_12, %c0_13] : memref<64x64xf32, #tpu.memory_space<vmem>>, vector<64x64xf32>
    %cst_14 = arith.constant dense<0.000000e+00> : vector<64x512xf32>
    %28 = tpu.matmul %27, %26, %cst_14 {dimension_numbers = #tpu.dot_dimension_numbers<[1], [0], [0], [1], [0, 0, 1, 1], [], []>} : vector<64x64xf32>, vector<64x512xf32>, vector<64x512xf32> -> vector<64x512xf32>
    %c0_15 = arith.constant 0 : index
    %c0_16 = arith.constant 0 : index
    %29 = vector.load %arg6[%c0_15, %c0_16] : memref<64x1xf32, #tpu.memory_space<vmem>>, vector<64x1xf32>
    %30 = vector.broadcast %29 : vector<64x1xf32> to vector<64x512xf32>
    %31 = arith.addf %28, %30 : vector<64x512xf32>
    %cst_17 = arith.constant 5.000000e-01 : f32
    %32 = vector.broadcast %cst_17 : f32 to vector<64x512xf32>
    %33 = arith.mulf %32, %31 : vector<64x512xf32>
    %cst_18 = arith.constant 5.000000e-01 : f32
    %34 = vector.broadcast %cst_18 : f32 to vector<64x512xf32>
    %35 = arith.mulf %34, %31 : vector<64x512xf32>
    %36 = math.tanh %35 : vector<64x512xf32>
    %cst_19 = arith.constant 1.000000e+00 : f32
    %37 = vector.broadcast %cst_19 : f32 to vector<64x512xf32>
    %38 = arith.addf %37, %36 : vector<64x512xf32>
    %39 = arith.mulf %33, %38 : vector<64x512xf32>
    %c0_20 = arith.constant 0 : index
    %c0_21 = arith.constant 0 : index
    %40 = vector.load %arg7[%c0_20, %c0_21] : memref<64x64xf32, #tpu.memory_space<vmem>>, vector<64x64xf32>
    %cst_22 = arith.constant dense<0.000000e+00> : vector<64x512xf32>
    %41 = tpu.matmul %40, %39, %cst_22 {dimension_numbers = #tpu.dot_dimension_numbers<[1], [0], [0], [1], [0, 0, 1, 1], [], []>} : vector<64x64xf32>, vector<64x512xf32>, vector<64x512xf32> -> vector<64x512xf32>
    %c0_23 = arith.constant 0 : index
    %c0_24 = arith.constant 0 : index
    %42 = vector.load %arg8[%c0_23, %c0_24] : memref<64x1xf32, #tpu.memory_space<vmem>>, vector<64x1xf32>
    %43 = vector.broadcast %42 : vector<64x1xf32> to vector<64x512xf32>
    %44 = arith.addf %41, %43 : vector<64x512xf32>
    %cst_25 = arith.constant 5.000000e-01 : f32
    %45 = vector.broadcast %cst_25 : f32 to vector<64x512xf32>
    %46 = arith.mulf %45, %44 : vector<64x512xf32>
    %cst_26 = arith.constant 5.000000e-01 : f32
    %47 = vector.broadcast %cst_26 : f32 to vector<64x512xf32>
    %48 = arith.mulf %47, %44 : vector<64x512xf32>
    %49 = math.tanh %48 : vector<64x512xf32>
    %cst_27 = arith.constant 1.000000e+00 : f32
    %50 = vector.broadcast %cst_27 : f32 to vector<64x512xf32>
    %51 = arith.addf %50, %49 : vector<64x512xf32>
    %52 = arith.mulf %46, %51 : vector<64x512xf32>
    %c0_28 = arith.constant 0 : index
    %c0_29 = arith.constant 0 : index
    %53 = vector.load %arg9[%c0_28, %c0_29] : memref<8x64xf32, #tpu.memory_space<vmem>>, vector<8x64xf32>
    %cst_30 = arith.constant dense<0.000000e+00> : vector<8x512xf32>
    %54 = tpu.matmul %53, %52, %cst_30 {dimension_numbers = #tpu.dot_dimension_numbers<[1], [0], [0], [1], [0, 0, 1, 1], [], []>} : vector<8x64xf32>, vector<64x512xf32>, vector<8x512xf32> -> vector<8x512xf32>
    %c0_31 = arith.constant 0 : index
    %c0_32 = arith.constant 0 : index
    %55 = vector.load %arg10[%c0_31, %c0_32] : memref<8x1xf32, #tpu.memory_space<vmem>>, vector<8x1xf32>
    %56 = vector.broadcast %55 : vector<8x1xf32> to vector<8x512xf32>
    %57 = arith.addf %54, %56 : vector<8x512xf32>
    %58 = math.cos %1 : vector<1x512xf32>
    %59 = math.sin %1 : vector<1x512xf32>
    %60 = arith.mulf %58, %58 : vector<1x512xf32>
    %61 = arith.mulf %59, %59 : vector<1x512xf32>
    %62 = arith.subf %60, %61 : vector<1x512xf32>
    %cst_33 = arith.constant 2.000000e+00 : f32
    %63 = vector.broadcast %cst_33 : f32 to vector<1x512xf32>
    %64 = arith.mulf %63, %58 : vector<1x512xf32>
    %65 = arith.mulf %64, %59 : vector<1x512xf32>
    %66 = arith.mulf %62, %58 : vector<1x512xf32>
    %67 = arith.mulf %65, %59 : vector<1x512xf32>
    %68 = arith.subf %66, %67 : vector<1x512xf32>
    %69 = arith.mulf %65, %58 : vector<1x512xf32>
    %70 = arith.mulf %62, %59 : vector<1x512xf32>
    %71 = arith.addf %69, %70 : vector<1x512xf32>
    %cst_34 = arith.constant 1.000000e+00 : f32
    %72 = vector.broadcast %cst_34 : f32 to vector<1x512xf32>
    %cst_35 = arith.constant 0.000000e+00 : f32
    %73 = vector.broadcast %cst_35 : f32 to vector<1x512xf32>
    %74 = tpu.concatenate %72, %58, %62, %68, %59, %65, %71, %73 in 0 : vector<1x512xf32>, vector<1x512xf32>, vector<1x512xf32>, vector<1x512xf32>, vector<1x512xf32>, vector<1x512xf32>, vector<1x512xf32>, vector<1x512xf32> -> vector<8x512xf32>
    %75 = arith.mulf %57, %74 : vector<8x512xf32>
    %c0_36 = arith.constant 0 : index
    %c0_37 = arith.constant 0 : index
    %76 = vector.load %arg11[%c0_36, %c0_37] : memref<8x512xf32, #tpu.memory_space<vmem>>, vector<8x512xf32>
    tpu.vector_store %arg11[%c0_36, %c0_37], %75 {strides = array<i32>} : memref<8x512xf32, #tpu.memory_space<vmem>>, vector<8x512xf32>,
    return
  }
  func.func @transform_0(%arg0: i32) -> (i32, i32) {
    %c0_i32 = arith.constant 0 : i32
    %c0_i32_0 = arith.constant 0 : i32
    return %c0_i32, %arg0 : i32, i32
  }
  func.func @transform_1(%arg0: i32) -> (i32, i32) {
    %c0_i32 = arith.constant 0 : i32
    %c0_i32_0 = arith.constant 0 : i32
    %c0_i32_1 = arith.constant 0 : i32
    return %c0_i32, %c0_i32_0 : i32, i32
  }
  func.func @transform_2(%arg0: i32) -> (i32, i32) {
    %c0_i32 = arith.constant 0 : i32
    %c0_i32_0 = arith.constant 0 : i32
    %c0_i32_1 = arith.constant 0 : i32
    return %c0_i32, %c0_i32_0 : i32, i32
  }
  func.func @transform_3(%arg0: i32) -> (i32, i32) {
    %c0_i32 = arith.constant 0 : i32
    %c0_i32_0 = arith.constant 0 : i32
    %c0_i32_1 = arith.constant 0 : i32
    return %c0_i32, %c0_i32_0 : i32, i32
  }
  func.func @transform_4(%arg0: i32) -> (i32, i32) {
    %c0_i32 = arith.constant 0 : i32
    %c0_i32_0 = arith.constant 0 : i32
    %c0_i32_1 = arith.constant 0 : i32
    return %c0_i32, %c0_i32_0 : i32, i32
  }
  func.func @transform_5(%arg0: i32) -> (i32, i32) {
    %c0_i32 = arith.constant 0 : i32
    %c0_i32_0 = arith.constant 0 : i32
    %c0_i32_1 = arith.constant 0 : i32
    return %c0_i32, %c0_i32_0 : i32, i32
  }
  func.func @transform_6(%arg0: i32) -> (i32, i32) {
    %c0_i32 = arith.constant 0 : i32
    %c0_i32_0 = arith.constant 0 : i32
    %c0_i32_1 = arith.constant 0 : i32
    return %c0_i32, %c0_i32_0 : i32, i32
  }
  func.func @transform_7(%arg0: i32) -> (i32, i32) {
    %c0_i32 = arith.constant 0 : i32
    %c0_i32_0 = arith.constant 0 : i32
    %c0_i32_1 = arith.constant 0 : i32
    return %c0_i32, %c0_i32_0 : i32, i32
  }
  func.func @transform_8(%arg0: i32) -> (i32, i32) {
    %c0_i32 = arith.constant 0 : i32
    %c0_i32_0 = arith.constant 0 : i32
    %c0_i32_1 = arith.constant 0 : i32
    return %c0_i32, %c0_i32_0 : i32, i32
  }
  func.func @transform_9(%arg0: i32) -> (i32, i32) {
    %c0_i32 = arith.constant 0 : i32
    %c0_i32_0 = arith.constant 0 : i32
    %c0_i32_1 = arith.constant 0 : i32
    return %c0_i32, %c0_i32_0 : i32, i32
  }
  func.func @transform_10(%arg0: i32) -> (i32, i32) {
    %c0_i32 = arith.constant 0 : i32
    %c0_i32_0 = arith.constant 0 : i32
    return %c0_i32, %arg0 : i32, i32
  }
}

</mosaic_0001>

<llo_original>
// kernel: tpu_custom_call.1
$region0: #{tpu_custom_call.1}
  #allocation0 [shape = 'u32[]', space=smem, size = 0x4, offset = 0x4, fixed_abs, tag = 'smem constant byte address 0x4 - core index']
  #allocation1 [shape = 'u32[144,128]{1,0:T(1,128)}', space=vmem, size = 0x12000, scoped, tag = 'internal scratch']
  %s0 = inlined_call_operand.vmem [shape: f32[2,512], index: 0, kind: input, shape index: {}]
  %s1 = inlined_call_operand.vmem [shape: f32[8,1], index: 1, kind: input, shape index: {}]
  %s2 = inlined_call_operand.vmem [shape: f32[64,8], index: 2, kind: input, shape index: {}]
  %s3 = inlined_call_operand.vmem [shape: f32[64,1], index: 3, kind: input, shape index: {}]
  %s4 = inlined_call_operand.vmem [shape: f32[64,64], index: 4, kind: input, shape index: {}]
  %s5 = inlined_call_operand.vmem [shape: f32[64,1], index: 5, kind: input, shape index: {}]
  %s6 = inlined_call_operand.vmem [shape: f32[64,64], index: 6, kind: input, shape index: {}]
  %s7 = inlined_call_operand.vmem [shape: f32[64,1], index: 7, kind: input, shape index: {}]
  %s8 = inlined_call_operand.vmem [shape: f32[8,64], index: 8, kind: input, shape index: {}]
  %s9 = inlined_call_operand.vmem [shape: f32[8,1], index: 9, kind: input, shape index: {}]
  %s10 = inlined_call_operand.hbm [shape: f32[8,512], index: 10, kind: output, shape index: {}]
  %s11 = sld [smem:[#allocation0]]
  $region50: #{tpu_custom_call.1} parent=0
    _
  %s13 = ssub.s32 1, %s11
  %s14 = scalar_select 0, %s13, %s11
  $region1: #{tpu_custom_call.1} parent=0
    #allocation2 [shape = 'u8[16384]{0}', space=vmem, size = 0x4000, scoped, tag = 'output window, operand 0, single buffered']
    #allocation3 [shape = 's32[1]{0}', space=sflag, size = 0x4, scoped, tag = 'scoped memory for tpu_custom_call.1']
    %15 = vsyncpa [#allocation3], 0
    // Predicated region
    $region2: #{tpu_custom_call.1} parent=1 // pred_check
      _
    $region3: #{tpu_custom_call.1} parent=1 // pred_check_branch
      %17 = sbr.rel (0) target = $region5
    $region4: #{tpu_custom_call.1} parent=1 // pred_region
      _
    $region5: #{tpu_custom_call.1} parent=1 // pred_fallthru
      _
    // Predicated region
    $region6: #{tpu_custom_call.1} parent=1 // pred_check
      _
    $region7: #{tpu_custom_call.1} parent=1 // pred_check_branch
      %19 = sbr.rel (0) target = $region9
    $region8: #{tpu_custom_call.1} parent=1 // pred_region
      _
    $region9: #{tpu_custom_call.1} parent=1 // pred_fallthru
      _
    // Predicated region
    $region10: #{tpu_custom_call.1} parent=1 // pred_check
      _
    $region11: #{tpu_custom_call.1} parent=1 // pred_check_branch
      %21 = sbr.rel (0) target = $region13
    $region12: #{tpu_custom_call.1} parent=1 // pred_region
      _
    $region13: #{tpu_custom_call.1} parent=1 // pred_fallthru
      _
    // Predicated region
    $region14: #{tpu_custom_call.1} parent=1 // pred_check
      _
    $region15: #{tpu_custom_call.1} parent=1 // pred_check_branch
      %23 = sbr.rel (0) target = $region17
    $region16: #{tpu_custom_call.1} parent=1 // pred_region
      _
    $region17: #{tpu_custom_call.1} parent=1 // pred_fallthru
      _
    // Predicated region
    $region18: #{tpu_custom_call.1} parent=1 // pred_check
      _
    $region19: #{tpu_custom_call.1} parent=1 // pred_check_branch
      %25 = sbr.rel (0) target = $region21
    $region20: #{tpu_custom_call.1} parent=1 // pred_region
      _
    $region21: #{tpu_custom_call.1} parent=1 // pred_fallthru
      _
    // Predicated region
    $region22: #{tpu_custom_call.1} parent=1 // pred_check
      _
    $region23: #{tpu_custom_call.1} parent=1 // pred_check_branch
      %27 = sbr.rel (0) target = $region25
    $region24: #{tpu_custom_call.1} parent=1 // pred_region
      _
    $region25: #{tpu_custom_call.1} parent=1 // pred_fallthru
      _
    // Predicated region
    $region26: #{tpu_custom_call.1} parent=1 // pred_check
      _
    $region27: #{tpu_custom_call.1} parent=1 // pred_check_branch
      %29 = sbr.rel (0) target = $region29
    $region28: #{tpu_custom_call.1} parent=1 // pred_region
      _
    $region29: #{tpu_custom_call.1} parent=1 // pred_fallthru
      _
    // Predicated region
    $region30: #{tpu_custom_call.1} parent=1 // pred_check
      _
    $region31: #{tpu_custom_call.1} parent=1 // pred_check_branch
      %31 = sbr.rel (0) target = $region33
    $region32: #{tpu_custom_call.1} parent=1 // pred_region
      _
    $region33: #{tpu_custom_call.1} parent=1 // pred_fallthru
      _
    // Predicated region
    $region34: #{tpu_custom_call.1} parent=1 // pred_check
      _
    $region35: #{tpu_custom_call.1} parent=1 // pred_check_branch
      %33 = sbr.rel (0) target = $region37
    $region36: #{tpu_custom_call.1} parent=1 // pred_region
      _
    $region37: #{tpu_custom_call.1} parent=1 // pred_fallthru
      _
    // Predicated region
    $region38: #{tpu_custom_call.1} parent=1 // pred_check
      _
    $region39: #{tpu_custom_call.1} parent=1 // pred_check_branch
      %35 = sbr.rel (0) target = $region41
    $region40: #{tpu_custom_call.1} parent=1 // pred_region
      _
    $region41: #{tpu_custom_call.1} parent=1 // pred_fallthru
      _
    %v36 = vld [vmem:[%s0] ss:$2 sm:$0xf]
    %s37 = scalar_lea.vmem %s0, 1
    %v38 = vld [vmem:[%s37] ss:$2 sm:$0xf]
    %v39 = vrcp.pop %v36
    %v40 = vmul.f32 %v36, %v39
    %v41 = vsub.f32 2.0, %v40
    %v42 = vmul.f32 %v39, %v41
    %v43 = vld [vmem:[%s1] sm:$0xff]
    %45 = vset.pattern.permute.xlu0 0
    %46 = vperm.xlu0 %45, %v43
    %v47 = vpop.permute.xlu0 %46
    %v50 = vlaneseq
    %v51 = vshrl.u32 %v50, 7
    %v52 = vsub.s32 0, %v51
    %v53 = vrot.slane %v36, %v52
    %v54 = vlaneseq
    %v55 = vshrl.u32 %v54, 7
    %v56 = vsub.s32 1, %v55
    %v57 = vrot.slane %v36, %v56
    %v58 = vlaneseq
    %v59 = vshrl.u32 %v58, 7
    %v60 = vsub.s32 2, %v59
    %v61 = vrot.slane %v36, %v60
    %v62 = vlaneseq
    %v63 = vshrl.u32 %v62, 7
    %v64 = vsub.s32 3, %v63
    %v65 = vrot.slane %v36, %v64
    %v70 = vmul.f32 %v47, %v53
    %v71 = vmul.f32 %v47, %v57
    %v72 = vmul.f32 %v47, %v61
    %v73 = vmul.f32 %v47, %v65
    %v74 = vand.u32 2147483647, %v70
    %vm75 = vcmp.le.f32.partialorder %v74, 0.7853982
    %vm76 = vcmp.lt.s32.totalorder %v70, 0
    %v77 = vand.u32 %v70, 2139095040
    %v78 = vshrl.u32 %v77, 23
    %v79 = vsub.s32 %v78, 127
    %v80 = vand.u32 2147483647, %v70
    %v81 = vand.u32 %v80, 8388607
    %v82 = vor.u32 %v81, 8388608
    %v83 = vsub.s32 0, %v82
    %v84 = vadd.s32 %v79, 1
    %vm85 = vcmp.gt.s32.totalorder %v84, 0
    %v86 = vsel %vm85, %v84, 0
    %v87 = vshrl.u32 %v86, 5
    %v88 = vand.u32 %v86, 31
    %v89 = vsub.s32 32, %v88
    %v90 = vshrl.u32 683565275, %v89
    %v91 = vshll.u32 683565275, %v88
    %v92 = vshrl.u32 2475754826, %v89
    %v93 = vor.u32 %v91, %v92
    %v94 = vshll.u32 2475754826, %v88
    %v95 = vshrl.u32 2131351028, %v89
    %v96 = vor.u32 %v94, %v95
    %v97 = vshll.u32 2131351028, %v88
    %v98 = vshrl.u32 2102212464, %v89
    %v99 = vor.u32 %v97, %v98
    %v100 = vshll.u32 2102212464, %v88
    %v101 = vshrl.u32 920167782, %v89
    %v102 = vor.u32 %v100, %v101
    %v103 = vshll.u32 920167782, %v88
    %v104 = vshrl.u32 1326507024, %v89
    %v105 = vor.u32 %v103, %v104
    %vm106 = vcmp.lt.s32.totalorder %v87, 1
    %vm107 = vcmp.lt.s32.totalorder %v87, 2
    %vm108 = vcmp.lt.s32.totalorder %v87, 3
    %vm109 = vcmp.lt.s32.totalorder %v87, 4
    %v110 = vsel %vm106, %v90, %v93
    %v111 = vsel %vm109, %v99, 2102212464
    %v112 = vsel %vm108, %v96, %v111
    %v113 = vsel %vm107, %v110, %v112
    %v114 = vsel %vm106, %v93, %v96
    %v115 = vsel %vm109, %v102, 920167782
    %v116 = vsel %vm108, %v99, %v115
    %v117 = vsel %vm107, %v114, %v116
    %v118 = vsel %vm106, %v96, %v99
    %v119 = vsel %vm109, %v105, 1326507024
    %v120 = vsel %vm108, %v102, %v119
    %v121 = vsel %vm107, %v118, %v120
    %v122 = vshll.u32 %v82, 8
    %v123 = vmul.u32.u64.compose %v122, %v121
    %v124 = vextract.low.u32 %v123
    %v125 = vextract.high.u32 %v123
    %v126 = vmul.u32.u64.compose %v122, %v117
    %v127 = vextract.low.u32 %v126
    %v128 = vextract.high.u32 %v126
    %v129 = vmul.u32 %v122, %v113
    %v130 = vadd.s32 %v125, %v127
    %vm131 = vc.u32 %v125, %v127
    %v132 = vadd.s32 %v128, 1
    %v133 = vsel %vm131, %v132, %v128
    %v134 = vadd.s32 %v129, %v133
    %v135 = vadd.s32 %v134, 536870912
    %v136 = vshrl.u32 %v135, 30
    %v137 = vshll.u32 %v136, 30
    %v138 = vsub.s32 %v134, %v137
    %vm139 = vcmp.lt.s32.totalorder %v138, 0
    %v140 = vsub.s32 0, %v138
    %v141 = vsel %vm139, %v140, %v138
    %v142 = vclz %v141
    %v143 = vsub.s32 %v142, 2
    %vm144 = vcmp.gt.s32.totalorder 0, %v143
    %v145 = vsel %vm144, 0, %v143
    %v146 = vsub.s32 32, %v145
    %v147 = vshll.u32 %v138, %v145
    %v148 = vshrl.u32 %v130, %v146
    %v149 = vor.u32 %v147, %v148
    %v150 = vsub.s32 4294967266, %v145
    %v151 = vadd.s32 %v150, 127
    %v152 = vshll.u32 %v151, 23
    %v153 = vor.u32 4788187, %v152
    %v154 = vand.u32 2147483647, %v153
    %v156 = vcvt.s32.f32 %v149
    %v157 = vmul.f32 %v156, %v154
    %v158 = vxor.u32 %v157, 2147483648
    %v159 = vsel %vm76, %v158, %v157
    %v160 = vsub.s32 4, %v136
    %v161 = vsel %vm76, %v160, %v136
    %v162 = vsel %vm75, %v70, %v159
    %v163 = vsel %vm75, 0, %v161
    %v164 = vcosq.f32.pop %v162
    %v165 = vsinq.f32.pop %v162
    %vm166 = vweird.f32 %v70
    %v167 = vadd.s32 %v163, 3
    %v168 = vand.u32 %v167, 3
    %vm169 = vcmp.lt.s32.totalorder %v168, 2
    %vm170 = vcmp.eq.s32.totalorder %v168, 0
    %v171 = vxor.u32 %v165, 2147483648
    %v172 = vsel %vm170, %v164, %v171
    %vm173 = vcmp.eq.s32.totalorder %v168, 2
    %v174 = vxor.u32 %v164, 2147483648
    %v175 = vsel %vm173, %v174, %v165
    %v176 = vsel %vm169, %v172, %v175
    %v177 = vsel %vm166, nan, %v176
    %v178 = vand.u32 2147483647, %v71
    %vm179 = vcmp.le.f32.partialorder %v178, 0.7853982
    %vm180 = vcmp.lt.s32.totalorder %v71, 0
    %v181 = vand.u32 %v71, 2139095040
    %v182 = vshrl.u32 %v181, 23
    %v183 = vsub.s32 %v182, 127
    %v184 = vand.u32 2147483647, %v71
    %v185 = vand.u32 %v184, 8388607
    %v186 = vor.u32 %v185, 8388608
    %v187 = vsub.s32 0, %v186
    %v188 = vadd.s32 %v183, 1
    %vm189 = vcmp.gt.s32.totalorder %v188, 0
    %v190 = vsel %vm189, %v188, 0
    %v191 = vshrl.u32 %v190, 5
    %v192 = vand.u32 %v190, 31
    %v193 = vsub.s32 32, %v192
    %v194 = vshrl.u32 683565275, %v193
    %v195 = vshll.u32 683565275, %v192
    %v196 = vshrl.u32 2475754826, %v193
    %v197 = vor.u32 %v195, %v196
    %v198 = vshll.u32 2475754826, %v192
    %v199 = vshrl.u32 2131351028, %v193
    %v200 = vor.u32 %v198, %v199
    %v201 = vshll.u32 2131351028, %v192
    %v202 = vshrl.u32 2102212464, %v193
    %v203 = vor.u32 %v201, %v202
    %v204 = vshll.u32 2102212464, %v192
    %v205 = vshrl.u32 920167782, %v193
    %v206 = vor.u32 %v204, %v205
    %v207 = vshll.u32 920167782, %v192
    %v208 = vshrl.u32 1326507024, %v193
    %v209 = vor.u32 %v207, %v208
    %vm210 = vcmp.lt.s32.totalorder %v191, 1
    %vm211 = vcmp.lt.s32.totalorder %v191, 2
    %vm212 = vcmp.lt.s32.totalorder %v191, 3
    %vm213 = vcmp.lt.s32.totalorder %v191, 4
    %v214 = vsel %vm210, %v194, %v197
    %v215 = vsel %vm213, %v203, 2102212464
    %v216 = vsel %vm212, %v200, %v215
    %v217 = vsel %vm211, %v214, %v216
    %v218 = vsel %vm210, %v197, %v200
    %v219 = vsel %vm213, %v206, 920167782
    %v220 = vsel %vm212, %v203, %v219
    %v221 = vsel %vm211, %v218, %v220
    %v222 = vsel %vm210, %v200, %v203
    %v223 = vsel %vm213, %v209, 1326507024
    %v224 = vsel %vm212, %v206, %v223
    %v225 = vsel %vm211, %v222, %v224
    %v226 = vshll.u32 %v186, 8
    %v227 = vmul.u32.u64.compose %v226, %v225
    %v228 = vextract.low.u32 %v227
    %v229 = vextract.high.u32 %v227
    %v230 = vmul.u32.u64.compose %v226, %v221
    %v231 = vextract.low.u32 %v230
    %v232 = vextract.high.u32 %v230
    %v233 = vmul.u32 %v226, %v217
    %v234 = vadd.s32 %v229, %v231
    %vm235 = vc.u32 %v229, %v231
    %v236 = vadd.s32 %v232, 1
    %v237 = vsel %vm235, %v236, %v232
    %v238 = vadd.s32 %v233, %v237
    %v239 = vadd.s32 %v238, 536870912
    %v240 = vshrl.u32 %v239, 30
    %v241 = vshll.u32 %v240, 30
    %v242 = vsub.s32 %v238, %v241
    %vm243 = vcmp.lt.s32.totalorder %v242, 0
    %v244 = vsub.s32 0, %v242
    %v245 = vsel %vm243, %v244, %v242
    %v246 = vclz %v245
    %v247 = vsub.s32 %v246, 2
    %vm248 = vcmp.gt.s32.totalorder 0, %v247
    %v249 = vsel %vm248, 0, %v247
    %v250 = vsub.s32 32, %v249
    %v251 = vshll.u32 %v242, %v249
    %v252 = vshrl.u32 %v234, %v250
    %v253 = vor.u32 %v251, %v252
    %v254 = vsub.s32 4294967266, %v249
    %v255 = vadd.s32 %v254, 127
    %v256 = vshll.u32 %v255, 23
    %v257 = vor.u32 4788187, %v256
    %v258 = vand.u32 2147483647, %v257
    %v260 = vcvt.s32.f32 %v253
    %v261 = vmul.f32 %v260, %v258
    %v262 = vxor.u32 %v261, 2147483648
    %v263 = vsel %vm180, %v262, %v261
    %v264 = vsub.s32 4, %v240
    %v265 = vsel %vm180, %v264, %v240
    %v266 = vsel %vm179, %v71, %v263
    %v267 = vsel %vm179, 0, %v265
    %v268 = vcosq.f32.pop %v266
    %v269 = vsinq.f32.pop %v266
    %vm270 = vweird.f32 %v71
    %v271 = vadd.s32 %v267, 3
    %v272 = vand.u32 %v271, 3
    %vm273 = vcmp.lt.s32.totalorder %v272, 2
    %vm274 = vcmp.eq.s32.totalorder %v272, 0
    %v275 = vxor.u32 %v269, 2147483648
    %v276 = vsel %vm274, %v268, %v275
    %vm277 = vcmp.eq.s32.totalorder %v272, 2
    %v278 = vxor.u32 %v268, 2147483648
    %v279 = vsel %vm277, %v278, %v269
    %v280 = vsel %vm273, %v276, %v279
    %v281 = vsel %vm270, nan, %v280
    %v282 = vand.u32 2147483647, %v72
    %vm283 = vcmp.le.f32.partialorder %v282, 0.7853982
    %vm284 = vcmp.lt.s32.totalorder %v72, 0
    %v285 = vand.u32 %v72, 2139095040
    %v286 = vshrl.u32 %v285, 23
    %v287 = vsub.s32 %v286, 127
    %v288 = vand.u32 2147483647, %v72
    %v289 = vand.u32 %v288, 8388607
    %v290 = vor.u32 %v289, 8388608
    %v291 = vsub.s32 0, %v290
    %v292 = vadd.s32 %v287, 1
    %vm293 = vcmp.gt.s32.totalorder %v292, 0
    %v294 = vsel %vm293, %v292, 0
    %v295 = vshrl.u32 %v294, 5
    %v296 = vand.u32 %v294, 31
    %v297 = vsub.s32 32, %v296
    %v298 = vshrl.u32 683565275, %v297
    %v299 = vshll.u32 683565275, %v296
    %v300 = vshrl.u32 2475754826, %v297
    %v301 = vor.u32 %v299, %v300
    %v302 = vshll.u32 2475754826, %v296
    %v303 = vshrl.u32 2131351028, %v297
    %v304 = vor.u32 %v302, %v303
    %v305 = vshll.u32 2131351028, %v296
    %v306 = vshrl.u32 2102212464, %v297
    %v307 = vor.u32 %v305, %v306
    %v308 = vshll.u32 2102212464, %v296
    %v309 = vshrl.u32 920167782, %v297
    %v310 = vor.u32 %v308, %v309
    %v311 = vshll.u32 920167782, %v296
    %v312 = vshrl.u32 1326507024, %v297
    %v313 = vor.u32 %v311, %v312
    %vm314 = vcmp.lt.s32.totalorder %v295, 1
    %vm315 = vcmp.lt.s32.totalorder %v295, 2
    %vm316 = vcmp.lt.s32.totalorder %v295, 3
    %vm317 = vcmp.lt.s32.totalorder %v295, 4
    %v318 = vsel %vm314, %v298, %v301
    %v319 = vsel %vm317, %v307, 2102212464
    %v320 = vsel %vm316, %v304, %v319
    %v321 = vsel %vm315, %v318, %v320
    %v322 = vsel %vm314, %v301, %v304
    %v323 = vsel %vm317, %v310, 920167782
    %v324 = vsel %vm316, %v307, %v323
    %v325 = vsel %vm315, %v322, %v324
    %v326 = vsel %vm314, %v304, %v307
    %v327 = vsel %vm317, %v313, 1326507024
    %v328 = vsel %vm316, %v310, %v327
    %v329 = vsel %vm315, %v326, %v328
    %v330 = vshll.u32 %v290, 8
    %v331 = vmul.u32.u64.compose %v330, %v329
    %v332 = vextract.low.u32 %v331
    %v333 = vextract.high.u32 %v331
    %v334 = vmul.u32.u64.compose %v330, %v325
    %v335 = vextract.low.u32 %v334
    %v336 = vextract.high.u32 %v334
    %v337 = vmul.u32 %v330, %v321
    %v338 = vadd.s32 %v333, %v335
    %vm339 = vc.u32 %v333, %v335
    %v340 = vadd.s32 %v336, 1
    %v341 = vsel %vm339, %v340, %v336
    %v342 = vadd.s32 %v337, %v341
    %v343 = vadd.s32 %v342, 536870912
    %v344 = vshrl.u32 %v343, 30
    %v345 = vshll.u32 %v344, 30
    %v346 = vsub.s32 %v342, %v345
    %vm347 = vcmp.lt.s32.totalorder %v346, 0
    %v348 = vsub.s32 0, %v346
    %v349 = vsel %vm347, %v348, %v346
    %v350 = vclz %v349
    %v351 = vsub.s32 %v350, 2
    %vm352 = vcmp.gt.s32.totalorder 0, %v351
    %v353 = vsel %vm352, 0, %v351
    %v354 = vsub.s32 32, %v353
    %v355 = vshll.u32 %v346, %v353
    %v356 = vshrl.u32 %v338, %v354
    %v357 = vor.u32 %v355, %v356
    %v358 = vsub.s32 4294967266, %v353
    %v359 = vadd.s32 %v358, 127
    %v360 = vshll.u32 %v359, 23
    %v361 = vor.u32 4788187, %v360
    %v362 = vand.u32 2147483647, %v361
    %v364 = vcvt.s32.f32 %v357
    %v365 = vmul.f32 %v364, %v362
    %v366 = vxor.u32 %v365, 2147483648
    %v367 = vsel %vm284, %v366, %v365
    %v368 = vsub.s32 4, %v344
    %v369 = vsel %vm284, %v368, %v344
    %v370 = vsel %vm283, %v72, %v367
    %v371 = vsel %vm283, 0, %v369
    %v372 = vcosq.f32.pop %v370
    %v373 = vsinq.f32.pop %v370
    %vm374 = vweird.f32 %v72
    %v375 = vadd.s32 %v371, 3
    %v376 = vand.u32 %v375, 3
    %vm377 = vcmp.lt.s32.totalorder %v376, 2
    %vm378 = vcmp.eq.s32.totalorder %v376, 0
    %v379 = vxor.u32 %v373, 2147483648
    %v380 = vsel %vm378, %v372, %v379
    %vm381 = vcmp.eq.s32.totalorder %v376, 2
    %v382 = vxor.u32 %v372, 2147483648
    %v383 = vsel %vm381, %v382, %v373
    %v384 = vsel %vm377, %v380, %v383
    %v385 = vsel %vm374, nan, %v384
    %v386 = vand.u32 2147483647, %v73
    %vm387 = vcmp.le.f32.partialorder %v386, 0.7853982
    %vm388 = vcmp.lt.s32.totalorder %v73, 0
    %v389 = vand.u32 %v73, 2139095040
    %v390 = vshrl.u32 %v389, 23
    %v391 = vsub.s32 %v390, 127
    %v392 = vand.u32 2147483647, %v73
    %v393 = vand.u32 %v392, 8388607
    %v394 = vor.u32 %v393, 8388608
    %v395 = vsub.s32 0, %v394
    %v396 = vadd.s32 %v391, 1
    %vm397 = vcmp.gt.s32.totalorder %v396, 0
    %v398 = vsel %vm397, %v396, 0
    %v399 = vshrl.u32 %v398, 5
    %v400 = vand.u32 %v398, 31
    %v401 = vsub.s32 32, %v400
    %v402 = vshrl.u32 683565275, %v401
    %v403 = vshll.u32 683565275, %v400
    %v404 = vshrl.u32 2475754826, %v401
    %v405 = vor.u32 %v403, %v404
    %v406 = vshll.u32 2475754826, %v400
    %v407 = vshrl.u32 2131351028, %v401
    %v408 = vor.u32 %v406, %v407
    %v409 = vshll.u32 2131351028, %v400
    %v410 = vshrl.u32 2102212464, %v401
    %v411 = vor.u32 %v409, %v410
    %v412 = vshll.u32 2102212464, %v400
    %v413 = vshrl.u32 920167782, %v401
    %v414 = vor.u32 %v412, %v413
    %v415 = vshll.u32 920167782, %v400
    %v416 = vshrl.u32 1326507024, %v401
    %v417 = vor.u32 %v415, %v416
    %vm418 = vcmp.lt.s32.totalorder %v399, 1
    %vm419 = vcmp.lt.s32.totalorder %v399, 2
    %vm420 = vcmp.lt.s32.totalorder %v399, 3
    %vm421 = vcmp.lt.s32.totalorder %v399, 4
    %v422 = vsel %vm418, %v402, %v405
    %v423 = vsel %vm421, %v411, 2102212464
    %v424 = vsel %vm420, %v408, %v423
    %v425 = vsel %vm419, %v422, %v424
    %v426 = vsel %vm418, %v405, %v408
    %v427 = vsel %vm421, %v414, 920167782
    %v428 = vsel %vm420, %v411, %v427
    %v429 = vsel %vm419, %v426, %v428
    %v430 = vsel %vm418, %v408, %v411
    %v431 = vsel %vm421, %v417, 1326507024
    %v432 = vsel %vm420, %v414, %v431
    %v433 = vsel %vm419, %v430, %v432
    %v434 = vshll.u32 %v394, 8
    %v435 = vmul.u32.u64.compose %v434, %v433
    %v436 = vextract.low.u32 %v435
    %v437 = vextract.high.u32 %v435
    %v438 = vmul.u32.u64.compose %v434, %v429
    %v439 = vextract.low.u32 %v438
    %v440 = vextract.high.u32 %v438
    %v441 = vmul.u32 %v434, %v425
    %v442 = vadd.s32 %v437, %v439
    %vm443 = vc.u32 %v437, %v439
    %v444 = vadd.s32 %v440, 1
    %v445 = vsel %vm443, %v444, %v440
    %v446 = vadd.s32 %v441, %v445
    %v447 = vadd.s32 %v446, 536870912
    %v448 = vshrl.u32 %v447, 30
    %v449 = vshll.u32 %v448, 30
    %v450 = vsub.s32 %v446, %v449
    %vm451 = vcmp.lt.s32.totalorder %v450, 0
    %v452 = vsub.s32 0, %v450
    %v453 = vsel %vm451, %v452, %v450
    %v454 = vclz %v453
    %v455 = vsub.s32 %v454, 2
    %vm456 = vcmp.gt.s32.totalorder 0, %v455
    %v457 = vsel %vm456, 0, %v455
    %v458 = vsub.s32 32, %v457
    %v459 = vshll.u32 %v450, %v457
    %v460 = vshrl.u32 %v442, %v458
    %v461 = vor.u32 %v459, %v460
    %v462 = vsub.s32 4294967266, %v457
    %v463 = vadd.s32 %v462, 127
    %v464 = vshll.u32 %v463, 23
    %v465 = vor.u32 4788187, %v464
    %v466 = vand.u32 2147483647, %v465
    %v468 = vcvt.s32.f32 %v461
    %v469 = vmul.f32 %v468, %v466
    %v470 = vxor.u32 %v469, 2147483648
    %v471 = vsel %vm388, %v470, %v469
    %v472 = vsub.s32 4, %v448
    %v473 = vsel %vm388, %v472, %v448
    %v474 = vsel %vm387, %v73, %v471
    %v475 = vsel %vm387, 0, %v473
    %v476 = vcosq.f32.pop %v474
    %v477 = vsinq.f32.pop %v474
    %vm478 = vweird.f32 %v73
    %v479 = vadd.s32 %v475, 3
    %v480 = vand.u32 %v479, 3
    %vm481 = vcmp.lt.s32.totalorder %v480, 2
    %vm482 = vcmp.eq.s32.totalorder %v480, 0
    %v483 = vxor.u32 %v477, 2147483648
    %v484 = vsel %vm482, %v476, %v483
    %vm485 = vcmp.eq.s32.totalorder %v480, 2
    %v486 = vxor.u32 %v476, 2147483648
    %v487 = vsel %vm485, %v486, %v477
    %v488 = vsel %vm481, %v484, %v487
    %v489 = vsel %vm478, nan, %v488
    %v491 = vlaneseq
    %v492 = vshrl.u32 %v491, 7
    %v493 = vsub.s32 0, %v492
    %v494 = vrot.slane %v42, %v493
    %v495 = vlaneseq
    %v496 = vshrl.u32 %v495, 7
    %v497 = vsub.s32 1, %v496
    %v498 = vrot.slane %v42, %v497
    %v499 = vlaneseq
    %v500 = vshrl.u32 %v499, 7
    %v501 = vsub.s32 2, %v500
    %v502 = vrot.slane %v42, %v501
    %v503 = vlaneseq
    %v504 = vshrl.u32 %v503, 7
    %v505 = vsub.s32 3, %v504
    %v506 = vrot.slane %v42, %v505
    %v511 = vmul.f32 %v177, %v494
    %v512 = vmul.f32 %v281, %v498
    %v513 = vmul.f32 %v385, %v502
    %v514 = vmul.f32 %v489, %v506
    %v515 = vld [vmem:[%s2] sm:$0xff]
    %v516 = vld [vmem:[%s2 + $0x8] sm:$0xff]
    %v517 = vld [vmem:[%s2 + $0x10] sm:$0xff]
    %v518 = vld [vmem:[%s2 + $0x18] sm:$0xff]
    %v519 = vld [vmem:[%s2 + $0x20] sm:$0xff]
    %v520 = vld [vmem:[%s2 + $0x28] sm:$0xff]
    %v521 = vld [vmem:[%s2 + $0x30] sm:$0xff]
    %v522 = vld [vmem:[%s2 + $0x38] sm:$0xff]
    %v523 = vld [vmem:[%s3] sm:$0xff]
    %v524 = vld [vmem:[%s3 + $0x8] sm:$0xff]
    %v525 = vld [vmem:[%s3 + $0x10] sm:$0xff]
    %v526 = vld [vmem:[%s3 + $0x18] sm:$0xff]
    %v527 = vld [vmem:[%s3 + $0x20] sm:$0xff]
    %v528 = vld [vmem:[%s3 + $0x28] sm:$0xff]
    %v529 = vld [vmem:[%s3 + $0x30] sm:$0xff]
    %v530 = vld [vmem:[%s3 + $0x38] sm:$0xff]
    %532 = vset.pattern.permute.xlu0 0
    %533 = vperm.xlu0 %532, %v523
    %v534 = vpop.permute.xlu0 %533
    %537 = vset.pattern.permute.xlu0 0
    %538 = vperm.xlu0 %537, %v524
    %v539 = vpop.permute.xlu0 %538
    %542 = vset.pattern.permute.xlu0 0
    %543 = vperm.xlu0 %542, %v525
    %v544 = vpop.permute.xlu0 %543
    %547 = vset.pattern.permute.xlu0 0
    %548 = vperm.xlu0 %547, %v526
    %v549 = vpop.permute.xlu0 %548
    %552 = vset.pattern.permute.xlu0 0
    %553 = vperm.xlu0 %552, %v527
    %v554 = vpop.permute.xlu0 %553
    %557 = vset.pattern.permute.xlu0 0
    %558 = vperm.xlu0 %557, %v528
    %v559 = vpop.permute.xlu0 %558
    %562 = vset.pattern.permute.xlu0 0
    %563 = vperm.xlu0 %562, %v529
    %v564 = vpop.permute.xlu0 %563
    %567 = vset.pattern.permute.xlu0 0
    %568 = vperm.xlu0 %567, %v530
    %v569 = vpop.permute.xlu0 %568
    %vm571 = vcmask 64512
    %v573 = vsel %vm571, %v515, 0
    %v576 = vsel %vm571, %v516, 0
    %v579 = vsel %vm571, %v517, 0
    %v582 = vsel %vm571, %v518, 0
    %v585 = vsel %vm571, %v519, 0
    %v588 = vsel %vm571, %v520, 0
    %v591 = vsel %vm571, %v521, 0
    %v594 = vsel %vm571, %v522, 0
    %596 = vmatprep.subr.mxu0 %v512
    %597 = vmatpush1.msra.mxu0 %v511
    %598 = vmatprep.subr.mxu0 0.0
    %599 = vmatpush1.msra.mxu0 0.0
    %600 = vmatprep.subr.mxu0 0.0
    %601 = vmatpush1.msra.mxu0 0.0
    %602 = vmatprep.subr.mxu0 0.0
    %603 = vmatpush1.msra.mxu0 0.0
    %604 = vmatprep.subr.mxu0 0.0
    %605 = vmatpush1.msra.mxu0 0.0
    %606 = vmatprep.subr.mxu0 0.0
    %607 = vmatpush1.msra.mxu0 0.0
    %608 = vmatprep.subr.mxu0 0.0
    %609 = vmatpush1.msra.mxu0 0.0
    %610 = vmatprep.subr.mxu0 0.0
    %611 = vmatpush1.msra.mxu0 0.0
    %612 = vmatprep.subr.mxu0 0.0
    %613 = vmatpush1.msra.mxu0 0.0
    %614 = vmatprep.subr.mxu0 0.0
    %615 = vmatpush1.msra.mxu0 0.0
    %616 = vmatprep.subr.mxu0 0.0
    %617 = vmatpush1.msra.mxu0 0.0
    %618 = vmatprep.subr.mxu0 0.0
    %619 = vmatpush1.msra.mxu0 0.0
    %620 = vmatprep.subr.mxu0 0.0
    %621 = vmatpush1.msra.mxu0 0.0
    %622 = vmatprep.subr.mxu0 0.0
    %623 = vmatpush1.msra.mxu0 0.0
    %624 = vmatprep.subr.mxu0 0.0
    %625 = vmatpush1.msra.mxu0 0.0
    %626 = vmatprep.subr.mxu0 0.0
    %627 = vmatpush1.msra.mxu0 0.0
    %628 = vmatprep.subr.mxu0 0.0
    %629 = vmatpush1.msra.mxu0 0.0
    %630 = vmatprep.subr.mxu0 0.0
    %631 = vmatpush1.msra.mxu0 0.0
    %632 = vmatprep.subr.mxu0 0.0
    %633 = vmatpush1.msra.mxu0 0.0
    %634 = vmatprep.subr.mxu0 0.0
    %635 = vmatpush1.msra.mxu0 0.0
    %636 = vmatprep.subr.mxu0 0.0
    %637 = vmatpush1.msra.mxu0 0.0
    %638 = vmatprep.subr.mxu0 0.0
    %639 = vmatpush1.msra.mxu0 0.0
    %640 = vmatprep.subr.mxu0 0.0
    %641 = vmatpush1.msra.mxu0 0.0
    %642 = vmatprep.subr.mxu0 0.0
    %643 = vmatpush1.msra.mxu0 0.0
    %644 = vmatprep.subr.mxu0 0.0
    %645 = vmatpush1.msra.mxu0 0.0
    %646 = vmatprep.subr.mxu0 0.0
    %647 = vmatpush1.msra.mxu0 0.0
    %648 = vmatprep.subr.mxu0 0.0
    %649 = vmatpush1.msra.mxu0 0.0
    %650 = vmatprep.subr.mxu0 0.0
    %651 = vmatpush1.msra.mxu0 0.0
    %652 = vmatprep.subr.mxu0 0.0
    %653 = vmatpush1.msra.mxu0 0.0
    %654 = vmatprep.subr.mxu0 0.0
    %655 = vmatpush1.msra.mxu0 0.0
    %656 = vmatprep.subr.mxu0 0.0
    %657 = vmatpush1.msra.mxu0 0.0
    %658 = vmatprep.subr.mxu0 0.0
    %659 = vmatpush1.msra.mxu0 0.0
    %660 = vmatprep.mubr.f32.mxu0 0.0
    %661 = vmatmul.mubr.f32.gmra.mrb[0].mxu0 %v573
    %v662 = vpop.f32.mrb[0].mxu0
    %v663 = vadd.f32 %v534, %v662
    %v664 = vpop.f32.mrb[0].mxu0
    %v665 = vadd.f32 %v534, %v664
    %666 = vmatprep.mubr.f32.mxu0 0.0
    %667 = vmatmul.mubr.f32.gmra.mrb[0].mxu0 %v576
    %v668 = vpop.f32.mrb[0].mxu0
    %v669 = vadd.f32 %v539, %v668
    %v670 = vpop.f32.mrb[0].mxu0
    %v671 = vadd.f32 %v539, %v670
    %672 = vmatprep.mubr.f32.mxu0 0.0
    %673 = vmatmul.mubr.f32.gmra.mrb[0].mxu0 %v579
    %v674 = vpop.f32.mrb[0].mxu0
    %v675 = vadd.f32 %v544, %v674
    %v676 = vpop.f32.mrb[0].mxu0
    %v677 = vadd.f32 %v544, %v676
    %678 = vmatprep.mubr.f32.mxu0 0.0
    %679 = vmatmul.mubr.f32.gmra.mrb[0].mxu0 %v582
    %v680 = vpop.f32.mrb[0].mxu0
    %v681 = vadd.f32 %v549, %v680
    %v682 = vpop.f32.mrb[0].mxu0
    %v683 = vadd.f32 %v549, %v682
    %684 = vmatprep.mubr.f32.mxu0 0.0
    %685 = vmatmul.mubr.f32.gmra.mrb[0].mxu0 %v585
    %v686 = vpop.f32.mrb[0].mxu0
    %v687 = vadd.f32 %v554, %v686
    %v688 = vpop.f32.mrb[0].mxu0
    %v689 = vadd.f32 %v554, %v688
    %690 = vmatprep.mubr.f32.mxu0 0.0
    %691 = vmatmul.mubr.f32.gmra.mrb[0].mxu0 %v588
    %v692 = vpop.f32.mrb[0].mxu0
    %v693 = vadd.f32 %v559, %v692
    %v694 = vpop.f32.mrb[0].mxu0
    %v695 = vadd.f32 %v559, %v694
    %696 = vmatprep.mubr.f32.mxu0 0.0
    %697 = vmatmul.mubr.f32.gmra.mrb[0].mxu0 %v591
    %v698 = vpop.f32.mrb[0].mxu0
    %v699 = vadd.f32 %v564, %v698
    %v700 = vpop.f32.mrb[0].mxu0
    %v701 = vadd.f32 %v564, %v700
    %702 = vmatprep.mubr.f32.mxu0 0.0
    %703 = vmatmul.mubr.f32.gmra.mrb[0].mxu0 %v594
    %v704 = vpop.f32.mrb[0].mxu0
    %v705 = vadd.f32 %v569, %v704
    %v706 = vpop.f32.mrb[0].mxu0
    %v707 = vadd.f32 %v569, %v706
    %708 = vdwg.mxu0
    %709 = vmatprep.subr.mxu0 %v514
    %710 = vmatpush1.msra.mxu0 %v513
    %711 = vmatprep.subr.mxu0 0.0
    %712 = vmatpush1.msra.mxu0 0.0
    %713 = vmatprep.subr.mxu0 0.0
    %714 = vmatpush1.msra.mxu0 0.0
    %715 = vmatprep.subr.mxu0 0.0
    %716 = vmatpush1.msra.mxu0 0.0
    %717 = vmatprep.subr.mxu0 0.0
    %718 = vmatpush1.msra.mxu0 0.0
    %719 = vmatprep.subr.mxu0 0.0
    %720 = vmatpush1.msra.mxu0 0.0
    %721 = vmatprep.subr.mxu0 0.0
    %722 = vmatpush1.msra.mxu0 0.0
    %723 = vmatprep.subr.mxu0 0.0
    %724 = vmatpush1.msra.mxu0 0.0
    %725 = vmatprep.subr.mxu0 0.0
    %726 = vmatpush1.msra.mxu0 0.0
    %727 = vmatprep.subr.mxu0 0.0
    %728 = vmatpush1.msra.mxu0 0.0
    %729 = vmatprep.subr.mxu0 0.0
    %730 = vmatpush1.msra.mxu0 0.0
    %731 = vmatprep.subr.mxu0 0.0
    %732 = vmatpush1.msra.mxu0 0.0
    %733 = vmatprep.subr.mxu0 0.0
    %734 = vmatpush1.msra.mxu0 0.0
    %735 = vmatprep.subr.mxu0 0.0
    %736 = vmatpush1.msra.mxu0 0.0
    %737 = vmatprep.subr.mxu0 0.0
    %738 = vmatpush1.msra.mxu0 0.0
    %739 = vmatprep.subr.mxu0 0.0
    %740 = vmatpush1.msra.mxu0 0.0
    %741 = vmatprep.subr.mxu0 0.0
    %742 = vmatpush1.msra.mxu0 0.0
    %743 = vmatprep.subr.mxu0 0.0
    %744 = vmatpush1.msra.mxu0 0.0
    %745 = vmatprep.subr.mxu0 0.0
    %746 = vmatpush1.msra.mxu0 0.0
    %747 = vmatprep.subr.mxu0 0.0
    %748 = vmatpush1.msra.mxu0 0.0
    %749 = vmatprep.subr.mxu0 0.0
    %750 = vmatpush1.msra.mxu0 0.0
    %751 = vmatprep.subr.mxu0 0.0
    %752 = vmatpush1.msra.mxu0 0.0
    %753 = vmatprep.subr.mxu0 0.0
    %754 = vmatpush1.msra.mxu0 0.0
    %755 = vmatprep.subr.mxu0 0.0
    %756 = vmatpush1.msra.mxu0 0.0
    %757 = vmatprep.subr.mxu0 0.0
    %758 = vmatpush1.msra.mxu0 0.0
    %759 = vmatprep.subr.mxu0 0.0
    %760 = vmatpush1.msra.mxu0 0.0
    %761 = vmatprep.subr.mxu0 0.0
    %762 = vmatpush1.msra.mxu0 0.0
    %763 = vmatprep.subr.mxu0 0.0
    %764 = vmatpush1.msra.mxu0 0.0
    %765 = vmatprep.subr.mxu0 0.0
    %766 = vmatpush1.msra.mxu0 0.0
    %767 = vmatprep.subr.mxu0 0.0
    %768 = vmatpush1.msra.mxu0 0.0
    %769 = vmatprep.subr.mxu0 0.0
    %770 = vmatpush1.msra.mxu0 0.0
    %771 = vmatprep.subr.mxu0 0.0
    %772 = vmatpush1.msra.mxu0 0.0
    %773 = vmatprep.mubr.f32.mxu0 0.0
    %774 = vmatmul.mubr.f32.gmra.mrb[0].mxu0 %v573
    %v775 = vpop.f32.mrb[0].mxu0
    %v776 = vadd.f32 %v534, %v775
    %v777 = vpop.f32.mrb[0].mxu0
    %v778 = vadd.f32 %v534, %v777
    %779 = vmatprep.mubr.f32.mxu0 0.0
    %780 = vmatmul.mubr.f32.gmra.mrb[0].mxu0 %v576
    %v781 = vpop.f32.mrb[0].mxu0
    %v782 = vadd.f32 %v539, %v781
    %v783 = vpop.f32.mrb[0].mxu0
    %v784 = vadd.f32 %v539, %v783
    %785 = vmatprep.mubr.f32.mxu0 0.0
    %786 = vmatmul.mubr.f32.gmra.mrb[0].mxu0 %v579
    %v787 = vpop.f32.mrb[0].mxu0
    %v788 = vadd.f32 %v544, %v787
    %v789 = vpop.f32.mrb[0].mxu0
    %v790 = vadd.f32 %v544, %v789
    %791 = vmatprep.mubr.f32.mxu0 0.0
    %792 = vmatmul.mubr.f32.gmra.mrb[0].mxu0 %v582
    %v793 = vpop.f32.mrb[0].mxu0
    %v794 = vadd.f32 %v549, %v793
    %v795 = vpop.f32.mrb[0].mxu0
    %v796 = vadd.f32 %v549, %v795
    %797 = vmatprep.mubr.f32.mxu0 0.0
    %798 = vmatmul.mubr.f32.gmra.mrb[0].mxu0 %v585
    %v799 = vpop.f32.mrb[0].mxu0
    %v800 = vadd.f32 %v554, %v799
    %v801 = vpop.f32.mrb[0].mxu0
    %v802 = vadd.f32 %v554, %v801
    %803 = vmatprep.mubr.f32.mxu0 0.0
    %804 = vmatmul.mubr.f32.gmra.mrb[0].mxu0 %v588
    %v805 = vpop.f32.mrb[0].mxu0
    %v806 = vadd.f32 %v559, %v805
    %v807 = vpop.f32.mrb[0].mxu0
    %v808 = vadd.f32 %v559, %v807
    %809 = vmatprep.mubr.f32.mxu0 0.0
    %810 = vmatmul.mubr.f32.gmra.mrb[0].mxu0 %v591
    %v811 = vpop.f32.mrb[0].mxu0
    %v812 = vadd.f32 %v564, %v811
    %v813 = vpop.f32.mrb[0].mxu0
    %v814 = vadd.f32 %v564, %v813
    %815 = vmatprep.mubr.f32.mxu0 0.0
    %816 = vmatmul.mubr.f32.gmra.mrb[0].mxu0 %v594
    %v817 = vpop.f32.mrb[0].mxu0
    %v818 = vadd.f32 %v569, %v817
    %v819 = vpop.f32.mrb[0].mxu0
    %v820 = vadd.f32 %v569, %v819
    %821 = vdwg.mxu0
    %v822 = vmul.f32 %v663, 0.5
    %v823 = vmul.f32 %v665, 0.5
    %v824 = vmul.f32 %v776, 0.5
    %v825 = vmul.f32 %v778, 0.5
    %v826 = vmul.f32 %v669, 0.5
    %v827 = vmul.f32 %v671, 0.5
    %v828 = vmul.f32 %v782, 0.5
    %v829 = vmul.f32 %v784, 0.5
    %v830 = vmul.f32 %v675, 0.5
    %v831 = vmul.f32 %v677, 0.5
    %v832 = vmul.f32 %v788, 0.5
    %v833 = vmul.f32 %v790, 0.5
    %v834 = vmul.f32 %v681, 0.5
    %v835 = vmul.f32 %v683, 0.5
    %v836 = vmul.f32 %v794, 0.5
    %v837 = vmul.f32 %v796, 0.5
    %v838 = vmul.f32 %v687, 0.5
    %v839 = vmul.f32 %v689, 0.5
    %v840 = vmul.f32 %v800, 0.5
    %v841 = vmul.f32 %v802, 0.5
    %v842 = vmul.f32 %v693, 0.5
    %v843 = vmul.f32 %v695, 0.5
    %v844 = vmul.f32 %v806, 0.5
    %v845 = vmul.f32 %v808, 0.5
    %v846 = vmul.f32 %v699, 0.5
    %v847 = vmul.f32 %v701, 0.5
    %v848 = vmul.f32 %v812, 0.5
    %v849 = vmul.f32 %v814, 0.5
    %v850 = vmul.f32 %v705, 0.5
    %v851 = vmul.f32 %v707, 0.5
    %v852 = vmul.f32 %v818, 0.5
    %v853 = vmul.f32 %v820, 0.5
    %v854 = vtanh.pop %v822
    %v855 = vtanh.pop %v823
    %v856 = vtanh.pop %v824
    %v857 = vtanh.pop %v825
    %v858 = vtanh.pop %v826
    %v859 = vtanh.pop %v827
    %v860 = vtanh.pop %v828
    %v861 = vtanh.pop %v829
    %v862 = vtanh.pop %v830
    %v863 = vtanh.pop %v831
    %v864 = vtanh.pop %v832
    %v865 = vtanh.pop %v833
    %v866 = vtanh.pop %v834
    %v867 = vtanh.pop %v835
    %v868 = vtanh.pop %v836
    %v869 = vtanh.pop %v837
    %v870 = vtanh.pop %v838
    %v871 = vtanh.pop %v839
    %v872 = vtanh.pop %v840
    %v873 = vtanh.pop %v841
    %v874 = vtanh.pop %v842
    %v875 = vtanh.pop %v843
    %v876 = vtanh.pop %v844
    %v877 = vtanh.pop %v845
    %v878 = vtanh.pop %v846
    %v879 = vtanh.pop %v847
    %v880 = vtanh.pop %v848
    %v881 = vtanh.pop %v849
    %v882 = vtanh.pop %v850
    %v883 = vtanh.pop %v851
    %v884 = vtanh.pop %v852
    %v885 = vtanh.pop %v853
    %v886 = vadd.f32 %v854, 1.0
    %v887 = vadd.f32 %v855, 1.0
    %v888 = vadd.f32 %v856, 1.0
    %v889 = vadd.f32 %v857, 1.0
    %v890 = vadd.f32 %v858, 1.0
    %v891 = vadd.f32 %v859, 1.0
    %v892 = vadd.f32 %v860, 1.0
    %v893 = vadd.f32 %v861, 1.0
    %v894 = vadd.f32 %v862, 1.0
    %v895 = vadd.f32 %v863, 1.0
    %v896 = vadd.f32 %v864, 1.0
    %v897 = vadd.f32 %v865, 1.0
    %v898 = vadd.f32 %v866, 1.0
    %v899 = vadd.f32 %v867, 1.0
    %v900 = vadd.f32 %v868, 1.0
    %v901 = vadd.f32 %v869, 1.0
    %v902 = vadd.f32 %v870, 1.0
    %v903 = vadd.f32 %v871, 1.0
    %v904 = vadd.f32 %v872, 1.0
    %v905 = vadd.f32 %v873, 1.0
    %v906 = vadd.f32 %v874, 1.0
    %v907 = vadd.f32 %v875, 1.0
    %v908 = vadd.f32 %v876, 1.0
    %v909 = vadd.f32 %v877, 1.0
    %v910 = vadd.f32 %v878, 1.0
    %v911 = vadd.f32 %v879, 1.0
    %v912 = vadd.f32 %v880, 1.0
    %v913 = vadd.f32 %v881, 1.0
    %v914 = vadd.f32 %v882, 1.0
    %v915 = vadd.f32 %v883, 1.0
    %v916 = vadd.f32 %v884, 1.0
    %v917 = vadd.f32 %v885, 1.0
    %v918 = vmul.f32 %v822, %v886
    %v919 = vmul.f32 %v823, %v887
    %v920 = vmul.f32 %v824, %v888
    %v921 = vmul.f32 %v825, %v889
    %v922 = vmul.f32 %v826, %v890
    %v923 = vmul.f32 %v827, %v891
    %v924 = vmul.f32 %v828, %v892
    %v925 = vmul.f32 %v829, %v893
    %v926 = vmul.f32 %v830, %v894
    %v927 = vmul.f32 %v831, %v895
    %v928 = vmul.f32 %v832, %v896
    %v929 = vmul.f32 %v833, %v897
    %v930 = vmul.f32 %v834, %v898
    %v931 = vmul.f32 %v835, %v899
    %v932 = vmul.f32 %v836, %v900
    %v933 = vmul.f32 %v837, %v901
    %v934 = vmul.f32 %v838, %v902
    %v935 = vmul.f32 %v839, %v903
    %v936 = vmul.f32 %v840, %v904
    %v937 = vmul.f32 %v841, %v905
    %v938 = vmul.f32 %v842, %v906
    %v939 = vmul.f32 %v843, %v907
    %v940 = vmul.f32 %v844, %v908
    %v941 = vmul.f32 %v845, %v909
    %v942 = vmul.f32 %v846, %v910
    %v943 = vmul.f32 %v847, %v911
    %v944 = vmul.f32 %v848, %v912
    %v945 = vmul.f32 %v849, %v913
    %v946 = vmul.f32 %v850, %v914
    %v947 = vmul.f32 %v851, %v915
    %v948 = vmul.f32 %v852, %v916
    %v949 = vmul.f32 %v853, %v917
    %v950 = vld [vmem:[%s4] sm:$0xff]
    %v951 = vld [vmem:[%s4 + $0x8] sm:$0xff]
    %v952 = vld [vmem:[%s4 + $0x10] sm:$0xff]
    %v953 = vld [vmem:[%s4 + $0x18] sm:$0xff]
    %v954 = vld [vmem:[%s4 + $0x20] sm:$0xff]
    %v955 = vld [vmem:[%s4 + $0x28] sm:$0xff]
    %v956 = vld [vmem:[%s4 + $0x30] sm:$0xff]
    %v957 = vld [vmem:[%s4 + $0x38] sm:$0xff]
    %v958 = vld [vmem:[%s5] sm:$0xff]
    %v959 = vld [vmem:[%s5 + $0x8] sm:$0xff]
    %v960 = vld [vmem:[%s5 + $0x10] sm:$0xff]
    %v961 = vld [vmem:[%s5 + $0x18] sm:$0xff]
    %v962 = vld [vmem:[%s5 + $0x20] sm:$0xff]
    %v963 = vld [vmem:[%s5 + $0x28] sm:$0xff]
    %v964 = vld [vmem:[%s5 + $0x30] sm:$0xff]
    %v965 = vld [vmem:[%s5 + $0x38] sm:$0xff]
    %967 = vset.pattern.permute.xlu0 0
    %968 = vperm.xlu0 %967, %v958
    %v969 = vpop.permute.xlu0 %968
    %972 = vset.pattern.permute.xlu0 0
    %973 = vperm.xlu0 %972, %v959
    %v974 = vpop.permute.xlu0 %973
    %977 = vset.pattern.permute.xlu0 0
    %978 = vperm.xlu0 %977, %v960
    %v979 = vpop.permute.xlu0 %978
    %982 = vset.pattern.permute.xlu0 0
    %983 = vperm.xlu0 %982, %v961
    %v984 = vpop.permute.xlu0 %983
    %987 = vset.pattern.permute.xlu0 0
    %988 = vperm.xlu0 %987, %v962
    %v989 = vpop.permute.xlu0 %988
    %992 = vset.pattern.permute.xlu0 0
    %993 = vperm.xlu0 %992, %v963
    %v994 = vpop.permute.xlu0 %993
    %997 = vset.pattern.permute.xlu0 0
    %998 = vperm.xlu0 %997, %v964
    %v999 = vpop.permute.xlu0 %998
    %1002 = vset.pattern.permute.xlu0 0
    %1003 = vperm.xlu0 %1002, %v965
    %v1004 = vpop.permute.xlu0 %1003
    %vm1006 = vcmask 523264
    %v1008 = vsel %vm1006, %v950, 0
    %v1011 = vsel %vm1006, %v951, 0
    %v1014 = vsel %vm1006, %v952, 0
    %v1017 = vsel %vm1006, %v953, 0
    %v1020 = vsel %vm1006, %v954, 0
    %v1023 = vsel %vm1006, %v955, 0
    %v1026 = vsel %vm1006, %v956, 0
    %v1029 = vsel %vm1006, %v957, 0
    %1031 = vmatprep.subr.mxu0 %v919
    %1032 = vmatpush1.msra.mxu0 %v918
    %1033 = vmatprep.subr.mxu0 %v923
    %1034 = vmatpush1.msra.mxu0 %v922
    %1035 = vmatprep.subr.mxu0 %v927
    %1036 = vmatpush1.msra.mxu0 %v926
    %1037 = vmatprep.subr.mxu0 %v931
    %1038 = vmatpush1.msra.mxu0 %v930
    %1039 = vmatprep.subr.mxu0 %v935
    %1040 = vmatpush1.msra.mxu0 %v934
    %1041 = vmatprep.subr.mxu0 %v939
    %1042 = vmatpush1.msra.mxu0 %v938
    %1043 = vmatprep.subr.mxu0 %v943
    %1044 = vmatpush1.msra.mxu0 %v942
    %1045 = vmatprep.subr.mxu0 %v947
    %1046 = vmatpush1.msra.mxu0 %v946
    %1047 = vmatprep.subr.mxu0 0.0
    %1048 = vmatpush1.msra.mxu0 0.0
    %1049 = vmatprep.subr.mxu0 0.0
    %1050 = vmatpush1.msra.mxu0 0.0
    %1051 = vmatprep.subr.mxu0 0.0
    %1052 = vmatpush1.msra.mxu0 0.0
    %1053 = vmatprep.subr.mxu0 0.0
    %1054 = vmatpush1.msra.mxu0 0.0
    %1055 = vmatprep.subr.mxu0 0.0
    %1056 = vmatpush1.msra.mxu0 0.0
    %1057 = vmatprep.subr.mxu0 0.0
    %1058 = vmatpush1.msra.mxu0 0.0
    %1059 = vmatprep.subr.mxu0 0.0
    %1060 = vmatpush1.msra.mxu0 0.0
    %1061 = vmatprep.subr.mxu0 0.0
    %1062 = vmatpush1.msra.mxu0 0.0
    %1063 = vmatprep.subr.mxu0 0.0
    %1064 = vmatpush1.msra.mxu0 0.0
    %1065 = vmatprep.subr.mxu0 0.0
    %1066 = vmatpush1.msra.mxu0 0.0
    %1067 = vmatprep.subr.mxu0 0.0
    %1068 = vmatpush1.msra.mxu0 0.0
    %1069 = vmatprep.subr.mxu0 0.0
    %1070 = vmatpush1.msra.mxu0 0.0
    %1071 = vmatprep.subr.mxu0 0.0
    %1072 = vmatpush1.msra.mxu0 0.0
    %1073 = vmatprep.subr.mxu0 0.0
    %1074 = vmatpush1.msra.mxu0 0.0
    %1075 = vmatprep.subr.mxu0 0.0
    %1076 = vmatpush1.msra.mxu0 0.0
    %1077 = vmatprep.subr.mxu0 0.0
    %1078 = vmatpush1.msra.mxu0 0.0
    %1079 = vmatprep.subr.mxu0 0.0
    %1080 = vmatpush1.msra.mxu0 0.0
    %1081 = vmatprep.subr.mxu0 0.0
    %1082 = vmatpush1.msra.mxu0 0.0
    %1083 = vmatprep.subr.mxu0 0.0
    %1084 = vmatpush1.msra.mxu0 0.0
    %1085 = vmatprep.subr.mxu0 0.0
    %1086 = vmatpush1.msra.mxu0 0.0
    %1087 = vmatprep.subr.mxu0 0.0
    %1088 = vmatpush1.msra.mxu0 0.0
    %1089 = vmatprep.subr.mxu0 0.0
    %1090 = vmatpush1.msra.mxu0 0.0
    %1091 = vmatprep.subr.mxu0 0.0
    %1092 = vmatpush1.msra.mxu0 0.0
    %1093 = vmatprep.subr.mxu0 0.0
    %1094 = vmatpush1.msra.mxu0 0.0
    %1095 = vmatprep.mubr.f32.mxu0 0.0
    %1096 = vmatmul.mubr.f32.gmra.mrb[0].mxu0 %v1008
    %v1097 = vpop.f32.mrb[0].mxu0
    %v1098 = vadd.f32 %v969, %v1097
    %v1099 = vpop.f32.mrb[0].mxu0
    %v1100 = vadd.f32 %v969, %v1099
    %1101 = vmatprep.mubr.f32.mxu0 0.0
    %1102 = vmatmul.mubr.f32.gmra.mrb[0].mxu0 %v1011
    %v1103 = vpop.f32.mrb[0].mxu0
    %v1104 = vadd.f32 %v974, %v1103
    %v1105 = vpop.f32.mrb[0].mxu0
    %v1106 = vadd.f32 %v974, %v1105
    %1107 = vmatprep.mubr.f32.mxu0 0.0
    %1108 = vmatmul.mubr.f32.gmra.mrb[0].mxu0 %v1014
    %v1109 = vpop.f32.mrb[0].mxu0
    %v1110 = vadd.f32 %v979, %v1109
    %v1111 = vpop.f32.mrb[0].mxu0
    %v1112 = vadd.f32 %v979, %v1111
    %1113 = vmatprep.mubr.f32.mxu0 0.0
    %1114 = vmatmul.mubr.f32.gmra.mrb[0].mxu0 %v1017
    %v1115 = vpop.f32.mrb[0].mxu0
    %v1116 = vadd.f32 %v984, %v1115
    %v1117 = vpop.f32.mrb[0].mxu0
    %v1118 = vadd.f32 %v984, %v1117
    %1119 = vmatprep.mubr.f32.mxu0 0.0
    %1120 = vmatmul.mubr.f32.gmra.mrb[0].mxu0 %v1020
    %v1121 = vpop.f32.mrb[0].mxu0
    %v1122 = vadd.f32 %v989, %v1121
    %v1123 = vpop.f32.mrb[0].mxu0
    %v1124 = vadd.f32 %v989, %v1123
    %1125 = vmatprep.mubr.f32.mxu0 0.0
    %1126 = vmatmul.mubr.f32.gmra.mrb[0].mxu0 %v1023
    %v1127 = vpop.f32.mrb[0].mxu0
    %v1128 = vadd.f32 %v994, %v1127
    %v1129 = vpop.f32.mrb[0].mxu0
    %v1130 = vadd.f32 %v994, %v1129
    %1131 = vmatprep.mubr.f32.mxu0 0.0
    %1132 = vmatmul.mubr.f32.gmra.mrb[0].mxu0 %v1026
    %v1133 = vpop.f32.mrb[0].mxu0
    %v1134 = vadd.f32 %v999, %v1133
    %v1135 = vpop.f32.mrb[0].mxu0
    %v1136 = vadd.f32 %v999, %v1135
    %1137 = vmatprep.mubr.f32.mxu0 0.0
    %1138 = vmatmul.mubr.f32.gmra.mrb[0].mxu0 %v1029
    %v1139 = vpop.f32.mrb[0].mxu0
    %v1140 = vadd.f32 %v1004, %v1139
    %v1141 = vpop.f32.mrb[0].mxu0
    %v1142 = vadd.f32 %v1004, %v1141
    %1143 = vdwg.mxu0
    %1144 = vmatprep.subr.mxu0 %v921
    %1145 = vmatpush1.msra.mxu0 %v920
    %1146 = vmatprep.subr.mxu0 %v925
    %1147 = vmatpush1.msra.mxu0 %v924
    %1148 = vmatprep.subr.mxu0 %v929
    %1149 = vmatpush1.msra.mxu0 %v928
    %1150 = vmatprep.subr.mxu0 %v933
    %1151 = vmatpush1.msra.mxu0 %v932
    %1152 = vmatprep.subr.mxu0 %v937
    %1153 = vmatpush1.msra.mxu0 %v936
    %1154 = vmatprep.subr.mxu0 %v941
    %1155 = vmatpush1.msra.mxu0 %v940
    %1156 = vmatprep.subr.mxu0 %v945
    %1157 = vmatpush1.msra.mxu0 %v944
    %1158 = vmatprep.subr.mxu0 %v949
    %1159 = vmatpush1.msra.mxu0 %v948
    %1160 = vmatprep.subr.mxu0 0.0
    %1161 = vmatpush1.msra.mxu0 0.0
    %1162 = vmatprep.subr.mxu0 0.0
    %1163 = vmatpush1.msra.mxu0 0.0
    %1164 = vmatprep.subr.mxu0 0.0
    %1165 = vmatpush1.msra.mxu0 0.0
    %1166 = vmatprep.subr.mxu0 0.0
    %1167 = vmatpush1.msra.mxu0 0.0
    %1168 = vmatprep.subr.mxu0 0.0
    %1169 = vmatpush1.msra.mxu0 0.0
    %1170 = vmatprep.subr.mxu0 0.0
    %1171 = vmatpush1.msra.mxu0 0.0
    %1172 = vmatprep.subr.mxu0 0.0
    %1173 = vmatpush1.msra.mxu0 0.0
    %1174 = vmatprep.subr.mxu0 0.0
    %1175 = vmatpush1.msra.mxu0 0.0
    %1176 = vmatprep.subr.mxu0 0.0
    %1177 = vmatpush1.msra.mxu0 0.0
    %1178 = vmatprep.subr.mxu0 0.0
    %1179 = vmatpush1.msra.mxu0 0.0
    %1180 = vmatprep.subr.mxu0 0.0
    %1181 = vmatpush1.msra.mxu0 0.0
    %1182 = vmatprep.subr.mxu0 0.0
    %1183 = vmatpush1.msra.mxu0 0.0
    %1184 = vmatprep.subr.mxu0 0.0
    %1185 = vmatpush1.msra.mxu0 0.0
    %1186 = vmatprep.subr.mxu0 0.0
    %1187 = vmatpush1.msra.mxu0 0.0
    %1188 = vmatprep.subr.mxu0 0.0
    %1189 = vmatpush1.msra.mxu0 0.0
    %1190 = vmatprep.subr.mxu0 0.0
    %1191 = vmatpush1.msra.mxu0 0.0
    %1192 = vmatprep.subr.mxu0 0.0
    %1193 = vmatpush1.msra.mxu0 0.0
    %1194 = vmatprep.subr.mxu0 0.0
    %1195 = vmatpush1.msra.mxu0 0.0
    %1196 = vmatprep.subr.mxu0 0.0
    %1197 = vmatpush1.msra.mxu0 0.0
    %1198 = vmatprep.subr.mxu0 0.0
    %1199 = vmatpush1.msra.mxu0 0.0
    %1200 = vmatprep.subr.mxu0 0.0
    %1201 = vmatpush1.msra.mxu0 0.0
    %1202 = vmatprep.subr.mxu0 0.0
    %1203 = vmatpush1.msra.mxu0 0.0
    %1204 = vmatprep.subr.mxu0 0.0
    %1205 = vmatpush1.msra.mxu0 0.0
    %1206 = vmatprep.subr.mxu0 0.0
    %1207 = vmatpush1.msra.mxu0 0.0
    %1208 = vmatprep.mubr.f32.mxu0 0.0
    %1209 = vmatmul.mubr.f32.gmra.mrb[0].mxu0 %v1008
    %v1210 = vpop.f32.mrb[0].mxu0
    %v1211 = vadd.f32 %v969, %v1210
    %v1212 = vpop.f32.mrb[0].mxu0
    %v1213 = vadd.f32 %v969, %v1212
    %1214 = vmatprep.mubr.f32.mxu0 0.0
    %1215 = vmatmul.mubr.f32.gmra.mrb[0].mxu0 %v1011
    %v1216 = vpop.f32.mrb[0].mxu0
    %v1217 = vadd.f32 %v974, %v1216
    %v1218 = vpop.f32.mrb[0].mxu0
    %v1219 = vadd.f32 %v974, %v1218
    %1220 = vmatprep.mubr.f32.mxu0 0.0
    %1221 = vmatmul.mubr.f32.gmra.mrb[0].mxu0 %v1014
    %v1222 = vpop.f32.mrb[0].mxu0
    %v1223 = vadd.f32 %v979, %v1222
    %v1224 = vpop.f32.mrb[0].mxu0
    %v1225 = vadd.f32 %v979, %v1224
    %1226 = vmatprep.mubr.f32.mxu0 0.0
    %1227 = vmatmul.mubr.f32.gmra.mrb[0].mxu0 %v1017
    %v1228 = vpop.f32.mrb[0].mxu0
    %v1229 = vadd.f32 %v984, %v1228
    %v1230 = vpop.f32.mrb[0].mxu0
    %v1231 = vadd.f32 %v984, %v1230
    %1232 = vmatprep.mubr.f32.mxu0 0.0
    %1233 = vmatmul.mubr.f32.gmra.mrb[0].mxu0 %v1020
    %v1234 = vpop.f32.mrb[0].mxu0
    %v1235 = vadd.f32 %v989, %v1234
    %v1236 = vpop.f32.mrb[0].mxu0
    %v1237 = vadd.f32 %v989, %v1236
    %1238 = vmatprep.mubr.f32.mxu0 0.0
    %1239 = vmatmul.mubr.f32.gmra.mrb[0].mxu0 %v1023
    %v1240 = vpop.f32.mrb[0].mxu0
    %v1241 = vadd.f32 %v994, %v1240
    %v1242 = vpop.f32.mrb[0].mxu0
    %v1243 = vadd.f32 %v994, %v1242
    %1244 = vmatprep.mubr.f32.mxu0 0.0
    %1245 = vmatmul.mubr.f32.gmra.mrb[0].mxu0 %v1026
    %v1246 = vpop.f32.mrb[0].mxu0
    %v1247 = vadd.f32 %v999, %v1246
    %v1248 = vpop.f32.mrb[0].mxu0
    %v1249 = vadd.f32 %v999, %v1248
    %1250 = vmatprep.mubr.f32.mxu0 0.0
    %1251 = vmatmul.mubr.f32.gmra.mrb[0].mxu0 %v1029
    %v1252 = vpop.f32.mrb[0].mxu0
    %v1253 = vadd.f32 %v1004, %v1252
    %v1254 = vpop.f32.mrb[0].mxu0
    %v1255 = vadd.f32 %v1004, %v1254
    %1256 = vdwg.mxu0
    %v1257 = vmul.f32 %v1098, 0.5
    %v1258 = vmul.f32 %v1100, 0.5
    %v1259 = vmul.f32 %v1211, 0.5
    %v1260 = vmul.f32 %v1213, 0.5
    %v1261 = vmul.f32 %v1104, 0.5
    %v1262 = vmul.f32 %v1106, 0.5
    %v1263 = vmul.f32 %v1217, 0.5
    %v1264 = vmul.f32 %v1219, 0.5
    %v1265 = vmul.f32 %v1110, 0.5
    %v1266 = vmul.f32 %v1112, 0.5
    %v1267 = vmul.f32 %v1223, 0.5
    %v1268 = vmul.f32 %v1225, 0.5
    %v1269 = vmul.f32 %v1116, 0.5
    %v1270 = vmul.f32 %v1118, 0.5
    %v1271 = vmul.f32 %v1229, 0.5
    %v1272 = vmul.f32 %v1231, 0.5
    %v1273 = vmul.f32 %v1122, 0.5
    %v1274 = vmul.f32 %v1124, 0.5
    %v1275 = vmul.f32 %v1235, 0.5
    %v1276 = vmul.f32 %v1237, 0.5
    %v1277 = vmul.f32 %v1128, 0.5
    %v1278 = vmul.f32 %v1130, 0.5
    %v1279 = vmul.f32 %v1241, 0.5
    %v1280 = vmul.f32 %v1243, 0.5
    %v1281 = vmul.f32 %v1134, 0.5
    %v1282 = vmul.f32 %v1136, 0.5
    %v1283 = vmul.f32 %v1247, 0.5
    %v1284 = vmul.f32 %v1249, 0.5
    %v1285 = vmul.f32 %v1140, 0.5
    %v1286 = vmul.f32 %v1142, 0.5
    %v1287 = vmul.f32 %v1253, 0.5
    %v1288 = vmul.f32 %v1255, 0.5
    %v1289 = vtanh.pop %v1257
    %v1290 = vtanh.pop %v1258
    %v1291 = vtanh.pop %v1259
    %v1292 = vtanh.pop %v1260
    %v1293 = vtanh.pop %v1261
    %v1294 = vtanh.pop %v1262
    %v1295 = vtanh.pop %v1263
    %v1296 = vtanh.pop %v1264
    %v1297 = vtanh.pop %v1265
    %v1298 = vtanh.pop %v1266
    %v1299 = vtanh.pop %v1267
    %v1300 = vtanh.pop %v1268
    %v1301 = vtanh.pop %v1269
    %v1302 = vtanh.pop %v1270
    %v1303 = vtanh.pop %v1271
    %v1304 = vtanh.pop %v1272
    %v1305 = vtanh.pop %v1273
    %v1306 = vtanh.pop %v1274
    %v1307 = vtanh.pop %v1275
    %v1308 = vtanh.pop %v1276
    %v1309 = vtanh.pop %v1277
    %v1310 = vtanh.pop %v1278
    %v1311 = vtanh.pop %v1279
    %v1312 = vtanh.pop %v1280
    %v1313 = vtanh.pop %v1281
    %v1314 = vtanh.pop %v1282
    %v1315 = vtanh.pop %v1283
    %v1316 = vtanh.pop %v1284
    %v1317 = vtanh.pop %v1285
    %v1318 = vtanh.pop %v1286
    %v1319 = vtanh.pop %v1287
    %v1320 = vtanh.pop %v1288
    %v1321 = vadd.f32 %v1289, 1.0
    %v1322 = vadd.f32 %v1290, 1.0
    %v1323 = vadd.f32 %v1291, 1.0
    %v1324 = vadd.f32 %v1292, 1.0
    %v1325 = vadd.f32 %v1293, 1.0
    %v1326 = vadd.f32 %v1294, 1.0
    %v1327 = vadd.f32 %v1295, 1.0
    %v1328 = vadd.f32 %v1296, 1.0
    %v1329 = vadd.f32 %v1297, 1.0
    %v1330 = vadd.f32 %v1298, 1.0
    %v1331 = vadd.f32 %v1299, 1.0
    %v1332 = vadd.f32 %v1300, 1.0
    %v1333 = vadd.f32 %v1301, 1.0
    %v1334 = vadd.f32 %v1302, 1.0
    %v1335 = vadd.f32 %v1303, 1.0
    %v1336 = vadd.f32 %v1304, 1.0
    %v1337 = vadd.f32 %v1305, 1.0
    %v1338 = vadd.f32 %v1306, 1.0
    %v1339 = vadd.f32 %v1307, 1.0
    %v1340 = vadd.f32 %v1308, 1.0
    %v1341 = vadd.f32 %v1309, 1.0
    %v1342 = vadd.f32 %v1310, 1.0
    %v1343 = vadd.f32 %v1311, 1.0
    %v1344 = vadd.f32 %v1312, 1.0
    %v1345 = vadd.f32 %v1313, 1.0
    %v1346 = vadd.f32 %v1314, 1.0
    %v1347 = vadd.f32 %v1315, 1.0
    %v1348 = vadd.f32 %v1316, 1.0
    %v1349 = vadd.f32 %v1317, 1.0
    %v1350 = vadd.f32 %v1318, 1.0
    %v1351 = vadd.f32 %v1319, 1.0
    %v1352 = vadd.f32 %v1320, 1.0
    %v1353 = vmul.f32 %v1257, %v1321
    %v1354 = vmul.f32 %v1258, %v1322
    %v1355 = vmul.f32 %v1259, %v1323
    %v1356 = vmul.f32 %v1260, %v1324
    %v1357 = vmul.f32 %v1261, %v1325
    %v1358 = vmul.f32 %v1262, %v1326
    %v1359 = vmul.f32 %v1263, %v1327
    %v1360 = vmul.f32 %v1264, %v1328
    %v1361 = vmul.f32 %v1265, %v1329
    %v1362 = vmul.f32 %v1266, %v1330
    %v1363 = vmul.f32 %v1267, %v1331
    %v1364 = vmul.f32 %v1268, %v1332
    %v1365 = vmul.f32 %v1269, %v1333
    %v1366 = vmul.f32 %v1270, %v1334
    %v1367 = vmul.f32 %v1271, %v1335
    %v1368 = vmul.f32 %v1272, %v1336
    %v1369 = vmul.f32 %v1273, %v1337
    %v1370 = vmul.f32 %v1274, %v1338
    %v1371 = vmul.f32 %v1275, %v1339
    %v1372 = vmul.f32 %v1276, %v1340
    %v1373 = vmul.f32 %v1277, %v1341
    %v1374 = vmul.f32 %v1278, %v1342
    %v1375 = vmul.f32 %v1279, %v1343
    %v1376 = vmul.f32 %v1280, %v1344
    %v1377 = vmul.f32 %v1281, %v1345
    %v1378 = vmul.f32 %v1282, %v1346
    %v1379 = vmul.f32 %v1283, %v1347
    %v1380 = vmul.f32 %v1284, %v1348
    %v1381 = vmul.f32 %v1285, %v1349
    %v1382 = vmul.f32 %v1286, %v1350
    %v1383 = vmul.f32 %v1287, %v1351
    %v1384 = vmul.f32 %v1288, %v1352
    %v1385 = vld [vmem:[%s6] sm:$0xff]
    %v1386 = vld [vmem:[%s6 + $0x8] sm:$0xff]
    %v1387 = vld [vmem:[%s6 + $0x10] sm:$0xff]
    %v1388 = vld [vmem:[%s6 + $0x18] sm:$0xff]
    %v1389 = vld [vmem:[%s6 + $0x20] sm:$0xff]
    %v1390 = vld [vmem:[%s6 + $0x28] sm:$0xff]
    %v1391 = vld [vmem:[%s6 + $0x30] sm:$0xff]
    %v1392 = vld [vmem:[%s6 + $0x38] sm:$0xff]
    %v1393 = vld [vmem:[%s7] sm:$0xff]
    %v1394 = vld [vmem:[%s7 + $0x8] sm:$0xff]
    %v1395 = vld [vmem:[%s7 + $0x10] sm:$0xff]
    %v1396 = vld [vmem:[%s7 + $0x18] sm:$0xff]
    %v1397 = vld [vmem:[%s7 + $0x20] sm:$0xff]
    %v1398 = vld [vmem:[%s7 + $0x28] sm:$0xff]
    %v1399 = vld [vmem:[%s7 + $0x30] sm:$0xff]
    %v1400 = vld [vmem:[%s7 + $0x38] sm:$0xff]
    %1402 = vset.pattern.permute.xlu0 0
    %1403 = vperm.xlu0 %1402, %v1393
    %v1404 = vpop.permute.xlu0 %1403
    %1407 = vset.pattern.permute.xlu0 0
    %1408 = vperm.xlu0 %1407, %v1394
    %v1409 = vpop.permute.xlu0 %1408
    %1412 = vset.pattern.permute.xlu0 0
    %1413 = vperm.xlu0 %1412, %v1395
    %v1414 = vpop.permute.xlu0 %1413
    %1417 = vset.pattern.permute.xlu0 0
    %1418 = vperm.xlu0 %1417, %v1396
    %v1419 = vpop.permute.xlu0 %1418
    %1422 = vset.pattern.permute.xlu0 0
    %1423 = vperm.xlu0 %1422, %v1397
    %v1424 = vpop.permute.xlu0 %1423
    %1427 = vset.pattern.permute.xlu0 0
    %1428 = vperm.xlu0 %1427, %v1398
    %v1429 = vpop.permute.xlu0 %1428
    %1432 = vset.pattern.permute.xlu0 0
    %1433 = vperm.xlu0 %1432, %v1399
    %v1434 = vpop.permute.xlu0 %1433
    %1437 = vset.pattern.permute.xlu0 0
    %1438 = vperm.xlu0 %1437, %v1400
    %v1439 = vpop.permute.xlu0 %1438
    %v1442 = vsel %vm1006, %v1385, 0
    %v1445 = vsel %vm1006, %v1386, 0
    %v1448 = vsel %vm1006, %v1387, 0
    %v1451 = vsel %vm1006, %v1388, 0
    %v1454 = vsel %vm1006, %v1389, 0
    %v1457 = vsel %vm1006, %v1390, 0
    %v1460 = vsel %vm1006, %v1391, 0
    %v1463 = vsel %vm1006, %v1392, 0
    %1465 = vmatprep.subr.mxu0 %v1354
    %1466 = vmatpush1.msra.mxu0 %v1353
    %1467 = vmatprep.subr.mxu0 %v1358
    %1468 = vmatpush1.msra.mxu0 %v1357
    %1469 = vmatprep.subr.mxu0 %v1362
    %1470 = vmatpush1.msra.mxu0 %v1361
    %1471 = vmatprep.subr.mxu0 %v1366
    %1472 = vmatpush1.msra.mxu0 %v1365
    %1473 = vmatprep.subr.mxu0 %v1370
    %1474 = vmatpush1.msra.mxu0 %v1369
    %1475 = vmatprep.subr.mxu0 %v1374
    %1476 = vmatpush1.msra.mxu0 %v1373
    %1477 = vmatprep.subr.mxu0 %v1378
    %1478 = vmatpush1.msra.mxu0 %v1377
    %1479 = vmatprep.subr.mxu0 %v1382
    %1480 = vmatpush1.msra.mxu0 %v1381
    %1481 = vmatprep.subr.mxu0 0.0
    %1482 = vmatpush1.msra.mxu0 0.0
    %1483 = vmatprep.subr.mxu0 0.0
    %1484 = vmatpush1.msra.mxu0 0.0
    %1485 = vmatprep.subr.mxu0 0.0
    %1486 = vmatpush1.msra.mxu0 0.0
    %1487 = vmatprep.subr.mxu0 0.0
    %1488 = vmatpush1.msra.mxu0 0.0
    %1489 = vmatprep.subr.mxu0 0.0
    %1490 = vmatpush1.msra.mxu0 0.0
    %1491 = vmatprep.subr.mxu0 0.0
    %1492 = vmatpush1.msra.mxu0 0.0
    %1493 = vmatprep.subr.mxu0 0.0
    %1494 = vmatpush1.msra.mxu0 0.0
    %1495 = vmatprep.subr.mxu0 0.0
    %1496 = vmatpush1.msra.mxu0 0.0
    %1497 = vmatprep.subr.mxu0 0.0
    %1498 = vmatpush1.msra.mxu0 0.0
    %1499 = vmatprep.subr.mxu0 0.0
    %1500 = vmatpush1.msra.mxu0 0.0
    %1501 = vmatprep.subr.mxu0 0.0
    %1502 = vmatpush1.msra.mxu0 0.0
    %1503 = vmatprep.subr.mxu0 0.0
    %1504 = vmatpush1.msra.mxu0 0.0
    %1505 = vmatprep.subr.mxu0 0.0
    %1506 = vmatpush1.msra.mxu0 0.0
    %1507 = vmatprep.subr.mxu0 0.0
    %1508 = vmatpush1.msra.mxu0 0.0
    %1509 = vmatprep.subr.mxu0 0.0
    %1510 = vmatpush1.msra.mxu0 0.0
    %1511 = vmatprep.subr.mxu0 0.0
    %1512 = vmatpush1.msra.mxu0 0.0
    %1513 = vmatprep.subr.mxu0 0.0
    %1514 = vmatpush1.msra.mxu0 0.0
    %1515 = vmatprep.subr.mxu0 0.0
    %1516 = vmatpush1.msra.mxu0 0.0
    %1517 = vmatprep.subr.mxu0 0.0
    %1518 = vmatpush1.msra.mxu0 0.0
    %1519 = vmatprep.subr.mxu0 0.0
    %1520 = vmatpush1.msra.mxu0 0.0
    %1521 = vmatprep.subr.mxu0 0.0
    %1522 = vmatpush1.msra.mxu0 0.0
    %1523 = vmatprep.subr.mxu0 0.0
    %1524 = vmatpush1.msra.mxu0 0.0
    %1525 = vmatprep.subr.mxu0 0.0
    %1526 = vmatpush1.msra.mxu0 0.0
    %1527 = vmatprep.subr.mxu0 0.0
    %1528 = vmatpush1.msra.mxu0 0.0
    %1529 = vmatprep.mubr.f32.mxu0 0.0
    %1530 = vmatmul.mubr.f32.gmra.mrb[0].mxu0 %v1442
    %v1531 = vpop.f32.mrb[0].mxu0
    %v1532 = vadd.f32 %v1404, %v1531
    %v1533 = vpop.f32.mrb[0].mxu0
    %v1534 = vadd.f32 %v1404, %v1533
    %1535 = vmatprep.mubr.f32.mxu0 0.0
    %1536 = vmatmul.mubr.f32.gmra.mrb[0].mxu0 %v1445
    %v1537 = vpop.f32.mrb[0].mxu0
    %v1538 = vadd.f32 %v1409, %v1537
    %v1539 = vpop.f32.mrb[0].mxu0
    %v1540 = vadd.f32 %v1409, %v1539
    %1541 = vmatprep.mubr.f32.mxu0 0.0
    %1542 = vmatmul.mubr.f32.gmra.mrb[0].mxu0 %v1448
    %v1543 = vpop.f32.mrb[0].mxu0
    %v1544 = vadd.f32 %v1414, %v1543
    %v1545 = vpop.f32.mrb[0].mxu0
    %v1546 = vadd.f32 %v1414, %v1545
    %1547 = vmatprep.mubr.f32.mxu0 0.0
    %1548 = vmatmul.mubr.f32.gmra.mrb[0].mxu0 %v1451
    %v1549 = vpop.f32.mrb[0].mxu0
    %v1550 = vadd.f32 %v1419, %v1549
    %v1551 = vpop.f32.mrb[0].mxu0
    %v1552 = vadd.f32 %v1419, %v1551
    %1553 = vmatprep.mubr.f32.mxu0 0.0
    %1554 = vmatmul.mubr.f32.gmra.mrb[0].mxu0 %v1454
    %v1555 = vpop.f32.mrb[0].mxu0
    %v1556 = vadd.f32 %v1424, %v1555
    %v1557 = vpop.f32.mrb[0].mxu0
    %v1558 = vadd.f32 %v1424, %v1557
    %1559 = vmatprep.mubr.f32.mxu0 0.0
    %1560 = vmatmul.mubr.f32.gmra.mrb[0].mxu0 %v1457
    %v1561 = vpop.f32.mrb[0].mxu0
    %v1562 = vadd.f32 %v1429, %v1561
    %v1563 = vpop.f32.mrb[0].mxu0
    %v1564 = vadd.f32 %v1429, %v1563
    %1565 = vmatprep.mubr.f32.mxu0 0.0
    %1566 = vmatmul.mubr.f32.gmra.mrb[0].mxu0 %v1460
    %v1567 = vpop.f32.mrb[0].mxu0
    %v1568 = vadd.f32 %v1434, %v1567
    %v1569 = vpop.f32.mrb[0].mxu0
    %v1570 = vadd.f32 %v1434, %v1569
    %1571 = vmatprep.mubr.f32.mxu0 0.0
    %1572 = vmatmul.mubr.f32.gmra.mrb[0].mxu0 %v1463
    %v1573 = vpop.f32.mrb[0].mxu0
    %v1574 = vadd.f32 %v1439, %v1573
    %v1575 = vpop.f32.mrb[0].mxu0
    %v1576 = vadd.f32 %v1439, %v1575
    %1577 = vdwg.mxu0
    %1578 = vmatprep.subr.mxu0 %v1356
    %1579 = vmatpush1.msra.mxu0 %v1355
    %1580 = vmatprep.subr.mxu0 %v1360
    %1581 = vmatpush1.msra.mxu0 %v1359
    %1582 = vmatprep.subr.mxu0 %v1364
    %1583 = vmatpush1.msra.mxu0 %v1363
    %1584 = vmatprep.subr.mxu0 %v1368
    %1585 = vmatpush1.msra.mxu0 %v1367
    %1586 = vmatprep.subr.mxu0 %v1372
    %1587 = vmatpush1.msra.mxu0 %v1371
    %1588 = vmatprep.subr.mxu0 %v1376
    %1589 = vmatpush1.msra.mxu0 %v1375
    %1590 = vmatprep.subr.mxu0 %v1380
    %1591 = vmatpush1.msra.mxu0 %v1379
    %1592 = vmatprep.subr.mxu0 %v1384
    %1593 = vmatpush1.msra.mxu0 %v1383
    %1594 = vmatprep.subr.mxu0 0.0
    %1595 = vmatpush1.msra.mxu0 0.0
    %1596 = vmatprep.subr.mxu0 0.0
    %1597 = vmatpush1.msra.mxu0 0.0
    %1598 = vmatprep.subr.mxu0 0.0
    %1599 = vmatpush1.msra.mxu0 0.0
    %1600 = vmatprep.subr.mxu0 0.0
    %1601 = vmatpush1.msra.mxu0 0.0
    %1602 = vmatprep.subr.mxu0 0.0
    %1603 = vmatpush1.msra.mxu0 0.0
    %1604 = vmatprep.subr.mxu0 0.0
    %1605 = vmatpush1.msra.mxu0 0.0
    %1606 = vmatprep.subr.mxu0 0.0
    %1607 = vmatpush1.msra.mxu0 0.0
    %1608 = vmatprep.subr.mxu0 0.0
    %1609 = vmatpush1.msra.mxu0 0.0
    %1610 = vmatprep.subr.mxu0 0.0
    %1611 = vmatpush1.msra.mxu0 0.0
    %1612 = vmatprep.subr.mxu0 0.0
    %1613 = vmatpush1.msra.mxu0 0.0
    %1614 = vmatprep.subr.mxu0 0.0
    %1615 = vmatpush1.msra.mxu0 0.0
    %1616 = vmatprep.subr.mxu0 0.0
    %1617 = vmatpush1.msra.mxu0 0.0
    %1618 = vmatprep.subr.mxu0 0.0
    %1619 = vmatpush1.msra.mxu0 0.0
    %1620 = vmatprep.subr.mxu0 0.0
    %1621 = vmatpush1.msra.mxu0 0.0
    %1622 = vmatprep.subr.mxu0 0.0
    %1623 = vmatpush1.msra.mxu0 0.0
    %1624 = vmatprep.subr.mxu0 0.0
    %1625 = vmatpush1.msra.mxu0 0.0
    %1626 = vmatprep.subr.mxu0 0.0
    %1627 = vmatpush1.msra.mxu0 0.0
    %1628 = vmatprep.subr.mxu0 0.0
    %1629 = vmatpush1.msra.mxu0 0.0
    %1630 = vmatprep.subr.mxu0 0.0
    %1631 = vmatpush1.msra.mxu0 0.0
    %1632 = vmatprep.subr.mxu0 0.0
    %1633 = vmatpush1.msra.mxu0 0.0
    %1634 = vmatprep.subr.mxu0 0.0
    %1635 = vmatpush1.msra.mxu0 0.0
    %1636 = vmatprep.subr.mxu0 0.0
    %1637 = vmatpush1.msra.mxu0 0.0
    %1638 = vmatprep.subr.mxu0 0.0
    %1639 = vmatpush1.msra.mxu0 0.0
    %1640 = vmatprep.subr.mxu0 0.0
    %1641 = vmatpush1.msra.mxu0 0.0
    %1642 = vmatprep.mubr.f32.mxu0 0.0
    %1643 = vmatmul.mubr.f32.gmra.mrb[0].mxu0 %v1442
    %v1644 = vpop.f32.mrb[0].mxu0
    %v1645 = vadd.f32 %v1404, %v1644
    %v1646 = vpop.f32.mrb[0].mxu0
    %v1647 = vadd.f32 %v1404, %v1646
    %1648 = vmatprep.mubr.f32.mxu0 0.0
    %1649 = vmatmul.mubr.f32.gmra.mrb[0].mxu0 %v1445
    %v1650 = vpop.f32.mrb[0].mxu0
    %v1651 = vadd.f32 %v1409, %v1650
    %v1652 = vpop.f32.mrb[0].mxu0
    %v1653 = vadd.f32 %v1409, %v1652
    %1654 = vmatprep.mubr.f32.mxu0 0.0
    %1655 = vmatmul.mubr.f32.gmra.mrb[0].mxu0 %v1448
    %v1656 = vpop.f32.mrb[0].mxu0
    %v1657 = vadd.f32 %v1414, %v1656
    %v1658 = vpop.f32.mrb[0].mxu0
    %v1659 = vadd.f32 %v1414, %v1658
    %1660 = vmatprep.mubr.f32.mxu0 0.0
    %1661 = vmatmul.mubr.f32.gmra.mrb[0].mxu0 %v1451
    %v1662 = vpop.f32.mrb[0].mxu0
    %v1663 = vadd.f32 %v1419, %v1662
    %v1664 = vpop.f32.mrb[0].mxu0
    %v1665 = vadd.f32 %v1419, %v1664
    %1666 = vmatprep.mubr.f32.mxu0 0.0
    %1667 = vmatmul.mubr.f32.gmra.mrb[0].mxu0 %v1454
    %v1668 = vpop.f32.mrb[0].mxu0
    %v1669 = vadd.f32 %v1424, %v1668
    %v1670 = vpop.f32.mrb[0].mxu0
    %v1671 = vadd.f32 %v1424, %v1670
    %1672 = vmatprep.mubr.f32.mxu0 0.0
    %1673 = vmatmul.mubr.f32.gmra.mrb[0].mxu0 %v1457
    %v1674 = vpop.f32.mrb[0].mxu0
    %v1675 = vadd.f32 %v1429, %v1674
    %v1676 = vpop.f32.mrb[0].mxu0
    %v1677 = vadd.f32 %v1429, %v1676
    %1678 = vmatprep.mubr.f32.mxu0 0.0
    %1679 = vmatmul.mubr.f32.gmra.mrb[0].mxu0 %v1460
    %v1680 = vpop.f32.mrb[0].mxu0
    %v1681 = vadd.f32 %v1434, %v1680
    %v1682 = vpop.f32.mrb[0].mxu0
    %v1683 = vadd.f32 %v1434, %v1682
    %1684 = vmatprep.mubr.f32.mxu0 0.0
    %1685 = vmatmul.mubr.f32.gmra.mrb[0].mxu0 %v1463
    %v1686 = vpop.f32.mrb[0].mxu0
    %v1687 = vadd.f32 %v1439, %v1686
    %v1688 = vpop.f32.mrb[0].mxu0
    %v1689 = vadd.f32 %v1439, %v1688
    %1690 = vdwg.mxu0
    %v1691 = vmul.f32 %v1532, 0.5
    %v1692 = vmul.f32 %v1534, 0.5
    %v1693 = vmul.f32 %v1645, 0.5
    %v1694 = vmul.f32 %v1647, 0.5
    %v1695 = vmul.f32 %v1538, 0.5
    %v1696 = vmul.f32 %v1540, 0.5
    %v1697 = vmul.f32 %v1651, 0.5
    %v1698 = vmul.f32 %v1653, 0.5
    %v1699 = vmul.f32 %v1544, 0.5
    %v1700 = vmul.f32 %v1546, 0.5
    %v1701 = vmul.f32 %v1657, 0.5
    %v1702 = vmul.f32 %v1659, 0.5
    %v1703 = vmul.f32 %v1550, 0.5
    %v1704 = vmul.f32 %v1552, 0.5
    %v1705 = vmul.f32 %v1663, 0.5
    %v1706 = vmul.f32 %v1665, 0.5
    %v1707 = vmul.f32 %v1556, 0.5
    %v1708 = vmul.f32 %v1558, 0.5
    %v1709 = vmul.f32 %v1669, 0.5
    %v1710 = vmul.f32 %v1671, 0.5
    %v1711 = vmul.f32 %v1562, 0.5
    %v1712 = vmul.f32 %v1564, 0.5
    %v1713 = vmul.f32 %v1675, 0.5
    %v1714 = vmul.f32 %v1677, 0.5
    %v1715 = vmul.f32 %v1568, 0.5
    %v1716 = vmul.f32 %v1570, 0.5
    %v1717 = vmul.f32 %v1681, 0.5
    %v1718 = vmul.f32 %v1683, 0.5
    %v1719 = vmul.f32 %v1574, 0.5
    %v1720 = vmul.f32 %v1576, 0.5
    %v1721 = vmul.f32 %v1687, 0.5
    %v1722 = vmul.f32 %v1689, 0.5
    %v1723 = vtanh.pop %v1691
    %v1724 = vtanh.pop %v1692
    %v1725 = vtanh.pop %v1693
    %v1726 = vtanh.pop %v1694
    %v1727 = vtanh.pop %v1695
    %v1728 = vtanh.pop %v1696
    %v1729 = vtanh.pop %v1697
    %v1730 = vtanh.pop %v1698
    %v1731 = vtanh.pop %v1699
    %v1732 = vtanh.pop %v1700
    %v1733 = vtanh.pop %v1701
    %v1734 = vtanh.pop %v1702
    %v1735 = vtanh.pop %v1703
    %v1736 = vtanh.pop %v1704
    %v1737 = vtanh.pop %v1705
    %v1738 = vtanh.pop %v1706
    %v1739 = vtanh.pop %v1707
    %v1740 = vtanh.pop %v1708
    %v1741 = vtanh.pop %v1709
    %v1742 = vtanh.pop %v1710
    %v1743 = vtanh.pop %v1711
    %v1744 = vtanh.pop %v1712
    %v1745 = vtanh.pop %v1713
    %v1746 = vtanh.pop %v1714
    %v1747 = vtanh.pop %v1715
    %v1748 = vtanh.pop %v1716
    %v1749 = vtanh.pop %v1717
    %v1750 = vtanh.pop %v1718
    %v1751 = vtanh.pop %v1719
    %v1752 = vtanh.pop %v1720
    %v1753 = vtanh.pop %v1721
    %v1754 = vtanh.pop %v1722
    %v1755 = vadd.f32 %v1723, 1.0
    %v1756 = vadd.f32 %v1724, 1.0
    %v1757 = vadd.f32 %v1725, 1.0
    %v1758 = vadd.f32 %v1726, 1.0
    %v1759 = vadd.f32 %v1727, 1.0
    %v1760 = vadd.f32 %v1728, 1.0
    %v1761 = vadd.f32 %v1729, 1.0
    %v1762 = vadd.f32 %v1730, 1.0
    %v1763 = vadd.f32 %v1731, 1.0
    %v1764 = vadd.f32 %v1732, 1.0
    %v1765 = vadd.f32 %v1733, 1.0
    %v1766 = vadd.f32 %v1734, 1.0
    %v1767 = vadd.f32 %v1735, 1.0
    %v1768 = vadd.f32 %v1736, 1.0
    %v1769 = vadd.f32 %v1737, 1.0
    %v1770 = vadd.f32 %v1738, 1.0
    %v1771 = vadd.f32 %v1739, 1.0
    %v1772 = vadd.f32 %v1740, 1.0
    %v1773 = vadd.f32 %v1741, 1.0
    %v1774 = vadd.f32 %v1742, 1.0
    %v1775 = vadd.f32 %v1743, 1.0
    %v1776 = vadd.f32 %v1744, 1.0
    %v1777 = vadd.f32 %v1745, 1.0
    %v1778 = vadd.f32 %v1746, 1.0
    %v1779 = vadd.f32 %v1747, 1.0
    %v1780 = vadd.f32 %v1748, 1.0
    %v1781 = vadd.f32 %v1749, 1.0
    %v1782 = vadd.f32 %v1750, 1.0
    %v1783 = vadd.f32 %v1751, 1.0
    %v1784 = vadd.f32 %v1752, 1.0
    %v1785 = vadd.f32 %v1753, 1.0
    %v1786 = vadd.f32 %v1754, 1.0
    %v1787 = vmul.f32 %v1691, %v1755
    %v1788 = vmul.f32 %v1692, %v1756
    %v1789 = vmul.f32 %v1693, %v1757
    %v1790 = vmul.f32 %v1694, %v1758
    %v1791 = vmul.f32 %v1695, %v1759
    %v1792 = vmul.f32 %v1696, %v1760
    %v1793 = vmul.f32 %v1697, %v1761
    %v1794 = vmul.f32 %v1698, %v1762
    %v1795 = vmul.f32 %v1699, %v1763
    %v1796 = vmul.f32 %v1700, %v1764
    %v1797 = vmul.f32 %v1701, %v1765
    %v1798 = vmul.f32 %v1702, %v1766
    %v1799 = vmul.f32 %v1703, %v1767
    %v1800 = vmul.f32 %v1704, %v1768
    %v1801 = vmul.f32 %v1705, %v1769
    %v1802 = vmul.f32 %v1706, %v1770
    %v1803 = vmul.f32 %v1707, %v1771
    %v1804 = vmul.f32 %v1708, %v1772
    %v1805 = vmul.f32 %v1709, %v1773
    %v1806 = vmul.f32 %v1710, %v1774
    %v1807 = vmul.f32 %v1711, %v1775
    %v1808 = vmul.f32 %v1712, %v1776
    %v1809 = vmul.f32 %v1713, %v1777
    %v1810 = vmul.f32 %v1714, %v1778
    %v1811 = vmul.f32 %v1715, %v1779
    %v1812 = vmul.f32 %v1716, %v1780
    %v1813 = vmul.f32 %v1717, %v1781
    %v1814 = vmul.f32 %v1718, %v1782
    %v1815 = vmul.f32 %v1719, %v1783
    %v1816 = vmul.f32 %v1720, %v1784
    %v1817 = vmul.f32 %v1721, %v1785
    %v1818 = vmul.f32 %v1722, %v1786
    %v1819 = vld [vmem:[%s8] sm:$0xff]
    %v1820 = vld [vmem:[%s9] sm:$0xff]
    %1822 = vset.pattern.permute.xlu0 0
    %1823 = vperm.xlu0 %1822, %v1820
    %v1824 = vpop.permute.xlu0 %1823
    %v1827 = vsel %vm1006, %v1819, 0
    %1829 = vmatprep.subr.mxu0 %v1788
    %1830 = vmatpush1.msra.mxu0 %v1787
    %1831 = vmatprep.subr.mxu0 %v1792
    %1832 = vmatpush1.msra.mxu0 %v1791
    %1833 = vmatprep.subr.mxu0 %v1796
    %1834 = vmatpush1.msra.mxu0 %v1795
    %1835 = vmatprep.subr.mxu0 %v1800
    %1836 = vmatpush1.msra.mxu0 %v1799
    %1837 = vmatprep.subr.mxu0 %v1804
    %1838 = vmatpush1.msra.mxu0 %v1803
    %1839 = vmatprep.subr.mxu0 %v1808
    %1840 = vmatpush1.msra.mxu0 %v1807
    %1841 = vmatprep.subr.mxu0 %v1812
    %1842 = vmatpush1.msra.mxu0 %v1811
    %1843 = vmatprep.subr.mxu0 %v1816
    %1844 = vmatpush1.msra.mxu0 %v1815
    %1845 = vmatprep.subr.mxu0 0.0
    %1846 = vmatpush1.msra.mxu0 0.0
    %1847 = vmatprep.subr.mxu0 0.0
    %1848 = vmatpush1.msra.mxu0 0.0
    %1849 = vmatprep.subr.mxu0 0.0
    %1850 = vmatpush1.msra.mxu0 0.0
    %1851 = vmatprep.subr.mxu0 0.0
    %1852 = vmatpush1.msra.mxu0 0.0
    %1853 = vmatprep.subr.mxu0 0.0
    %1854 = vmatpush1.msra.mxu0 0.0
    %1855 = vmatprep.subr.mxu0 0.0
    %1856 = vmatpush1.msra.mxu0 0.0
    %1857 = vmatprep.subr.mxu0 0.0
    %1858 = vmatpush1.msra.mxu0 0.0
    %1859 = vmatprep.subr.mxu0 0.0
    %1860 = vmatpush1.msra.mxu0 0.0
    %1861 = vmatprep.subr.mxu0 0.0
    %1862 = vmatpush1.msra.mxu0 0.0
    %1863 = vmatprep.subr.mxu0 0.0
    %1864 = vmatpush1.msra.mxu0 0.0
    %1865 = vmatprep.subr.mxu0 0.0
    %1866 = vmatpush1.msra.mxu0 0.0
    %1867 = vmatprep.subr.mxu0 0.0
    %1868 = vmatpush1.msra.mxu0 0.0
    %1869 = vmatprep.subr.mxu0 0.0
    %1870 = vmatpush1.msra.mxu0 0.0
    %1871 = vmatprep.subr.mxu0 0.0
    %1872 = vmatpush1.msra.mxu0 0.0
    %1873 = vmatprep.subr.mxu0 0.0
    %1874 = vmatpush1.msra.mxu0 0.0
    %1875 = vmatprep.subr.mxu0 0.0
    %1876 = vmatpush1.msra.mxu0 0.0
    %1877 = vmatprep.subr.mxu0 0.0
    %1878 = vmatpush1.msra.mxu0 0.0
    %1879 = vmatprep.subr.mxu0 0.0
    %1880 = vmatpush1.msra.mxu0 0.0
    %1881 = vmatprep.subr.mxu0 0.0
    %1882 = vmatpush1.msra.mxu0 0.0
    %1883 = vmatprep.subr.mxu0 0.0
    %1884 = vmatpush1.msra.mxu0 0.0
    %1885 = vmatprep.subr.mxu0 0.0
    %1886 = vmatpush1.msra.mxu0 0.0
    %1887 = vmatprep.subr.mxu0 0.0
    %1888 = vmatpush1.msra.mxu0 0.0
    %1889 = vmatprep.subr.mxu0 0.0
    %1890 = vmatpush1.msra.mxu0 0.0
    %1891 = vmatprep.subr.mxu0 0.0
    %1892 = vmatpush1.msra.mxu0 0.0
    %1893 = vmatprep.mubr.f32.mxu0 0.0
    %1894 = vmatmul.mubr.f32.gmra.mrb[0].mxu0 %v1827
    %v1895 = vpop.f32.mrb[0].mxu0
    %v1896 = vadd.f32 %v1824, %v1895
    %v1897 = vpop.f32.mrb[0].mxu0
    %v1898 = vadd.f32 %v1824, %v1897
    %1899 = vdwg.mxu0
    %1900 = vmatprep.subr.mxu0 %v1790
    %1901 = vmatpush1.msra.mxu0 %v1789
    %1902 = vmatprep.subr.mxu0 %v1794
    %1903 = vmatpush1.msra.mxu0 %v1793
    %1904 = vmatprep.subr.mxu0 %v1798
    %1905 = vmatpush1.msra.mxu0 %v1797
    %1906 = vmatprep.subr.mxu0 %v1802
    %1907 = vmatpush1.msra.mxu0 %v1801
    %1908 = vmatprep.subr.mxu0 %v1806
    %1909 = vmatpush1.msra.mxu0 %v1805
    %1910 = vmatprep.subr.mxu0 %v1810
    %1911 = vmatpush1.msra.mxu0 %v1809
    %1912 = vmatprep.subr.mxu0 %v1814
    %1913 = vmatpush1.msra.mxu0 %v1813
    %1914 = vmatprep.subr.mxu0 %v1818
    %1915 = vmatpush1.msra.mxu0 %v1817
    %1916 = vmatprep.subr.mxu0 0.0
    %1917 = vmatpush1.msra.mxu0 0.0
    %1918 = vmatprep.subr.mxu0 0.0
    %1919 = vmatpush1.msra.mxu0 0.0
    %1920 = vmatprep.subr.mxu0 0.0
    %1921 = vmatpush1.msra.mxu0 0.0
    %1922 = vmatprep.subr.mxu0 0.0
    %1923 = vmatpush1.msra.mxu0 0.0
    %1924 = vmatprep.subr.mxu0 0.0
    %1925 = vmatpush1.msra.mxu0 0.0
    %1926 = vmatprep.subr.mxu0 0.0
    %1927 = vmatpush1.msra.mxu0 0.0
    %1928 = vmatprep.subr.mxu0 0.0
    %1929 = vmatpush1.msra.mxu0 0.0
    %1930 = vmatprep.subr.mxu0 0.0
    %1931 = vmatpush1.msra.mxu0 0.0
    %1932 = vmatprep.subr.mxu0 0.0
    %1933 = vmatpush1.msra.mxu0 0.0
    %1934 = vmatprep.subr.mxu0 0.0
    %1935 = vmatpush1.msra.mxu0 0.0
    %1936 = vmatprep.subr.mxu0 0.0
    %1937 = vmatpush1.msra.mxu0 0.0
    %1938 = vmatprep.subr.mxu0 0.0
    %1939 = vmatpush1.msra.mxu0 0.0
    %1940 = vmatprep.subr.mxu0 0.0
    %1941 = vmatpush1.msra.mxu0 0.0
    %1942 = vmatprep.subr.mxu0 0.0
    %1943 = vmatpush1.msra.mxu0 0.0
    %1944 = vmatprep.subr.mxu0 0.0
    %1945 = vmatpush1.msra.mxu0 0.0
    %1946 = vmatprep.subr.mxu0 0.0
    %1947 = vmatpush1.msra.mxu0 0.0
    %1948 = vmatprep.subr.mxu0 0.0
    %1949 = vmatpush1.msra.mxu0 0.0
    %1950 = vmatprep.subr.mxu0 0.0
    %1951 = vmatpush1.msra.mxu0 0.0
    %1952 = vmatprep.subr.mxu0 0.0
    %1953 = vmatpush1.msra.mxu0 0.0
    %1954 = vmatprep.subr.mxu0 0.0
    %1955 = vmatpush1.msra.mxu0 0.0
    %1956 = vmatprep.subr.mxu0 0.0
    %1957 = vmatpush1.msra.mxu0 0.0
    %1958 = vmatprep.subr.mxu0 0.0
    %1959 = vmatpush1.msra.mxu0 0.0
    %1960 = vmatprep.subr.mxu0 0.0
    %1961 = vmatpush1.msra.mxu0 0.0
    %1962 = vmatprep.subr.mxu0 0.0
    %1963 = vmatpush1.msra.mxu0 0.0
    %1964 = vmatprep.mubr.f32.mxu0 0.0
    %1965 = vmatmul.mubr.f32.gmra.mrb[0].mxu0 %v1827
    %v1966 = vpop.f32.mrb[0].mxu0
    %v1967 = vadd.f32 %v1824, %v1966
    %v1968 = vpop.f32.mrb[0].mxu0
    %v1969 = vadd.f32 %v1824, %v1968
    %1970 = vdwg.mxu0
    %v1971 = vand.u32 2147483647, %v38
    %vm1972 = vcmp.le.f32.partialorder %v1971, 0.7853982
    %vm1973 = vcmp.lt.s32.totalorder %v38, 0
    %v1974 = vand.u32 %v38, 2139095040
    %v1975 = vshrl.u32 %v1974, 23
    %v1976 = vsub.s32 %v1975, 127
    %v1977 = vand.u32 2147483647, %v38
    %v1978 = vand.u32 %v1977, 8388607
    %v1979 = vor.u32 %v1978, 8388608
    %v1980 = vsub.s32 0, %v1979
    %v1981 = vadd.s32 %v1976, 1
    %vm1982 = vcmp.gt.s32.totalorder %v1981, 0
    %v1983 = vsel %vm1982, %v1981, 0
    %v1984 = vshrl.u32 %v1983, 5
    %v1985 = vand.u32 %v1983, 31
    %v1986 = vsub.s32 32, %v1985
    %v1987 = vshrl.u32 683565275, %v1986
    %v1988 = vshll.u32 683565275, %v1985
    %v1989 = vshrl.u32 2475754826, %v1986
    %v1990 = vor.u32 %v1988, %v1989
    %v1991 = vshll.u32 2475754826, %v1985
    %v1992 = vshrl.u32 2131351028, %v1986
    %v1993 = vor.u32 %v1991, %v1992
    %v1994 = vshll.u32 2131351028, %v1985
    %v1995 = vshrl.u32 2102212464, %v1986
    %v1996 = vor.u32 %v1994, %v1995
    %v1997 = vshll.u32 2102212464, %v1985
    %v1998 = vshrl.u32 920167782, %v1986
    %v1999 = vor.u32 %v1997, %v1998
    %v2000 = vshll.u32 920167782, %v1985
    %v2001 = vshrl.u32 1326507024, %v1986
    %v2002 = vor.u32 %v2000, %v2001
    %vm2003 = vcmp.lt.s32.totalorder %v1984, 1
    %vm2004 = vcmp.lt.s32.totalorder %v1984, 2
    %vm2005 = vcmp.lt.s32.totalorder %v1984, 3
    %vm2006 = vcmp.lt.s32.totalorder %v1984, 4
    %v2007 = vsel %vm2003, %v1987, %v1990
    %v2008 = vsel %vm2006, %v1996, 2102212464
    %v2009 = vsel %vm2005, %v1993, %v2008
    %v2010 = vsel %vm2004, %v2007, %v2009
    %v2011 = vsel %vm2003, %v1990, %v1993
    %v2012 = vsel %vm2006, %v1999, 920167782
    %v2013 = vsel %vm2005, %v1996, %v2012
    %v2014 = vsel %vm2004, %v2011, %v2013
    %v2015 = vsel %vm2003, %v1993, %v1996
    %v2016 = vsel %vm2006, %v2002, 1326507024
    %v2017 = vsel %vm2005, %v1999, %v2016
    %v2018 = vsel %vm2004, %v2015, %v2017
    %v2019 = vshll.u32 %v1979, 8
    %v2020 = vmul.u32.u64.compose %v2019, %v2018
    %v2021 = vextract.low.u32 %v2020
    %v2022 = vextract.high.u32 %v2020
    %v2023 = vmul.u32.u64.compose %v2019, %v2014
    %v2024 = vextract.low.u32 %v2023
    %v2025 = vextract.high.u32 %v2023
    %v2026 = vmul.u32 %v2019, %v2010
    %v2027 = vadd.s32 %v2022, %v2024
    %vm2028 = vc.u32 %v2022, %v2024
    %v2029 = vadd.s32 %v2025, 1
    %v2030 = vsel %vm2028, %v2029, %v2025
    %v2031 = vadd.s32 %v2026, %v2030
    %v2032 = vadd.s32 %v2031, 536870912
    %v2033 = vshrl.u32 %v2032, 30
    %v2034 = vshll.u32 %v2033, 30
    %v2035 = vsub.s32 %v2031, %v2034
    %vm2036 = vcmp.lt.s32.totalorder %v2035, 0
    %v2037 = vsub.s32 0, %v2035
    %v2038 = vsel %vm2036, %v2037, %v2035
    %v2039 = vclz %v2038
    %v2040 = vsub.s32 %v2039, 2
    %vm2041 = vcmp.gt.s32.totalorder 0, %v2040
    %v2042 = vsel %vm2041, 0, %v2040
    %v2043 = vsub.s32 32, %v2042
    %v2044 = vshll.u32 %v2035, %v2042
    %v2045 = vshrl.u32 %v2027, %v2043
    %v2046 = vor.u32 %v2044, %v2045
    %v2047 = vsub.s32 4294967266, %v2042
    %v2048 = vadd.s32 %v2047, 127
    %v2049 = vshll.u32 %v2048, 23
    %v2050 = vor.u32 4788187, %v2049
    %v2051 = vand.u32 2147483647, %v2050
    %v2053 = vcvt.s32.f32 %v2046
    %v2054 = vmul.f32 %v2053, %v2051
    %v2055 = vxor.u32 %v2054, 2147483648
    %v2056 = vsel %vm1973, %v2055, %v2054
    %v2057 = vsub.s32 4, %v2033
    %v2058 = vsel %vm1973, %v2057, %v2033
    %v2059 = vsel %vm1972, %v38, %v2056
    %v2060 = vsel %vm1972, 0, %v2058
    %v2061 = vcosq.f32.pop %v2059
    %v2062 = vsinq.f32.pop %v2059
    %vm2063 = vweird.f32 %v38
    %v2064 = vand.u32 %v2060, 3
    %vm2065 = vcmp.lt.s32.totalorder %v2064, 2
    %vm2066 = vcmp.eq.s32.totalorder %v2064, 0
    %v2067 = vxor.u32 %v2062, 2147483648
    %v2068 = vsel %vm2066, %v2061, %v2067
    %vm2069 = vcmp.eq.s32.totalorder %v2064, 2
    %v2070 = vxor.u32 %v2061, 2147483648
    %v2071 = vsel %vm2069, %v2070, %v2062
    %v2072 = vsel %vm2065, %v2068, %v2071
    %v2073 = vsel %vm2063, nan, %v2072
    %v2074 = vand.u32 2147483647, %v38
    %vm2075 = vcmp.le.f32.partialorder %v2074, 0.7853982
    %vm2076 = vcmp.lt.s32.totalorder %v38, 0
    %v2077 = vand.u32 %v38, 2139095040
    %v2078 = vshrl.u32 %v2077, 23
    %v2079 = vsub.s32 %v2078, 127
    %v2080 = vand.u32 2147483647, %v38
    %v2081 = vand.u32 %v2080, 8388607
    %v2082 = vor.u32 %v2081, 8388608
    %v2083 = vsub.s32 0, %v2082
    %v2084 = vadd.s32 %v2079, 1
    %vm2085 = vcmp.gt.s32.totalorder %v2084, 0
    %v2086 = vsel %vm2085, %v2084, 0
    %v2087 = vshrl.u32 %v2086, 5
    %v2088 = vand.u32 %v2086, 31
    %v2089 = vsub.s32 32, %v2088
    %v2090 = vshrl.u32 683565275, %v2089
    %v2091 = vshll.u32 683565275, %v2088
    %v2092 = vshrl.u32 2475754826, %v2089
    %v2093 = vor.u32 %v2091, %v2092
    %v2094 = vshll.u32 2475754826, %v2088
    %v2095 = vshrl.u32 2131351028, %v2089
    %v2096 = vor.u32 %v2094, %v2095
    %v2097 = vshll.u32 2131351028, %v2088
    %v2098 = vshrl.u32 2102212464, %v2089
    %v2099 = vor.u32 %v2097, %v2098
    %v2100 = vshll.u32 2102212464, %v2088
    %v2101 = vshrl.u32 920167782, %v2089
    %v2102 = vor.u32 %v2100, %v2101
    %v2103 = vshll.u32 920167782, %v2088
    %v2104 = vshrl.u32 1326507024, %v2089
    %v2105 = vor.u32 %v2103, %v2104
    %vm2106 = vcmp.lt.s32.totalorder %v2087, 1
    %vm2107 = vcmp.lt.s32.totalorder %v2087, 2
    %vm2108 = vcmp.lt.s32.totalorder %v2087, 3
    %vm2109 = vcmp.lt.s32.totalorder %v2087, 4
    %v2110 = vsel %vm2106, %v2090, %v2093
    %v2111 = vsel %vm2109, %v2099, 2102212464
    %v2112 = vsel %vm2108, %v2096, %v2111
    %v2113 = vsel %vm2107, %v2110, %v2112
    %v2114 = vsel %vm2106, %v2093, %v2096
    %v2115 = vsel %vm2109, %v2102, 920167782
    %v2116 = vsel %vm2108, %v2099, %v2115
    %v2117 = vsel %vm2107, %v2114, %v2116
    %v2118 = vsel %vm2106, %v2096, %v2099
    %v2119 = vsel %vm2109, %v2105, 1326507024
    %v2120 = vsel %vm2108, %v2102, %v2119
    %v2121 = vsel %vm2107, %v2118, %v2120
    %v2122 = vshll.u32 %v2082, 8
    %v2123 = vmul.u32.u64.compose %v2122, %v2121
    %v2124 = vextract.low.u32 %v2123
    %v2125 = vextract.high.u32 %v2123
    %v2126 = vmul.u32.u64.compose %v2122, %v2117
    %v2127 = vextract.low.u32 %v2126
    %v2128 = vextract.high.u32 %v2126
    %v2129 = vmul.u32 %v2122, %v2113
    %v2130 = vadd.s32 %v2125, %v2127
    %vm2131 = vc.u32 %v2125, %v2127
    %v2132 = vadd.s32 %v2128, 1
    %v2133 = vsel %vm2131, %v2132, %v2128
    %v2134 = vadd.s32 %v2129, %v2133
    %v2135 = vadd.s32 %v2134, 536870912
    %v2136 = vshrl.u32 %v2135, 30
    %v2137 = vshll.u32 %v2136, 30
    %v2138 = vsub.s32 %v2134, %v2137
    %vm2139 = vcmp.lt.s32.totalorder %v2138, 0
    %v2140 = vsub.s32 0, %v2138
    %v2141 = vsel %vm2139, %v2140, %v2138
    %v2142 = vclz %v2141
    %v2143 = vsub.s32 %v2142, 2
    %vm2144 = vcmp.gt.s32.totalorder 0, %v2143
    %v2145 = vsel %vm2144, 0, %v2143
    %v2146 = vsub.s32 32, %v2145
    %v2147 = vshll.u32 %v2138, %v2145
    %v2148 = vshrl.u32 %v2130, %v2146
    %v2149 = vor.u32 %v2147, %v2148
    %v2150 = vsub.s32 4294967266, %v2145
    %v2151 = vadd.s32 %v2150, 127
    %v2152 = vshll.u32 %v2151, 23
    %v2153 = vor.u32 4788187, %v2152
    %v2154 = vand.u32 2147483647, %v2153
    %v2156 = vcvt.s32.f32 %v2149
    %v2157 = vmul.f32 %v2156, %v2154
    %v2158 = vxor.u32 %v2157, 2147483648
    %v2159 = vsel %vm2076, %v2158, %v2157
    %v2160 = vsub.s32 4, %v2136
    %v2161 = vsel %vm2076, %v2160, %v2136
    %v2162 = vsel %vm2075, %v38, %v2159
    %v2163 = vsel %vm2075, 0, %v2161
    %v2164 = vcosq.f32.pop %v2162
    %v2165 = vsinq.f32.pop %v2162
    %vm2166 = vweird.f32 %v38
    %v2167 = vadd.s32 %v2163, 3
    %v2168 = vand.u32 %v2167, 3
    %vm2169 = vcmp.lt.s32.totalorder %v2168, 2
    %vm2170 = vcmp.eq.s32.totalorder %v2168, 0
    %v2171 = vxor.u32 %v2165, 2147483648
    %v2172 = vsel %vm2170, %v2164, %v2171
    %vm2173 = vcmp.eq.s32.totalorder %v2168, 2
    %v2174 = vxor.u32 %v2164, 2147483648
    %v2175 = vsel %vm2173, %v2174, %v2165
    %v2176 = vsel %vm2169, %v2172, %v2175
    %v2177 = vsel %vm2166, nan, %v2176
    %v2178 = vmul.f32 %v2073, %v2073
    %v2179 = vmul.f32 %v2177, %v2177
    %v2180 = vsub.f32 %v2178, %v2179
    %v2181 = vmul.f32 %v2073, 2.0
    %v2182 = vmul.f32 %v2181, %v2177
    %v2183 = vmul.f32 %v2180, %v2073
    %v2184 = vmul.f32 %v2182, %v2177
    %v2185 = vsub.f32 %v2183, %v2184
    %v2186 = vmul.f32 %v2182, %v2073
    %v2187 = vmul.f32 %v2180, %v2177
    %v2188 = vadd.f32 %v2186, %v2187
    %v2190 = vlaneseq
    %v2191 = vshrl.u32 %v2190, 7
    %v2192 = vsub.s32 0, %v2191
    %v2193 = vrot.slane %v2073, %v2192
    %v2194 = vlaneseq
    %v2195 = vshrl.u32 %v2194, 7
    %v2196 = vsub.s32 1, %v2195
    %v2197 = vrot.slane %v2073, %v2196
    %v2198 = vlaneseq
    %v2199 = vshrl.u32 %v2198, 7
    %v2200 = vsub.s32 2, %v2199
    %v2201 = vrot.slane %v2073, %v2200
    %v2202 = vlaneseq
    %v2203 = vshrl.u32 %v2202, 7
    %v2204 = vsub.s32 3, %v2203
    %v2205 = vrot.slane %v2073, %v2204
    %v2211 = vlaneseq
    %v2212 = vshrl.u32 %v2211, 7
    %v2213 = vsub.s32 0, %v2212
    %v2214 = vrot.slane %v2180, %v2213
    %v2215 = vlaneseq
    %v2216 = vshrl.u32 %v2215, 7
    %v2217 = vsub.s32 1, %v2216
    %v2218 = vrot.slane %v2180, %v2217
    %v2219 = vlaneseq
    %v2220 = vshrl.u32 %v2219, 7
    %v2221 = vsub.s32 2, %v2220
    %v2222 = vrot.slane %v2180, %v2221
    %v2223 = vlaneseq
    %v2224 = vshrl.u32 %v2223, 7
    %v2225 = vsub.s32 3, %v2224
    %v2226 = vrot.slane %v2180, %v2225
    %v2232 = vlaneseq
    %v2233 = vshrl.u32 %v2232, 7
    %v2234 = vsub.s32 0, %v2233
    %v2235 = vrot.slane %v2185, %v2234
    %v2236 = vlaneseq
    %v2237 = vshrl.u32 %v2236, 7
    %v2238 = vsub.s32 1, %v2237
    %v2239 = vrot.slane %v2185, %v2238
    %v2240 = vlaneseq
    %v2241 = vshrl.u32 %v2240, 7
    %v2242 = vsub.s32 2, %v2241
    %v2243 = vrot.slane %v2185, %v2242
    %v2244 = vlaneseq
    %v2245 = vshrl.u32 %v2244, 7
    %v2246 = vsub.s32 3, %v2245
    %v2247 = vrot.slane %v2185, %v2246
    %v2253 = vlaneseq
    %v2254 = vshrl.u32 %v2253, 7
    %v2255 = vsub.s32 0, %v2254
    %v2256 = vrot.slane %v2177, %v2255
    %v2257 = vlaneseq
    %v2258 = vshrl.u32 %v2257, 7
    %v2259 = vsub.s32 1, %v2258
    %v2260 = vrot.slane %v2177, %v2259
    %v2261 = vlaneseq
    %v2262 = vshrl.u32 %v2261, 7
    %v2263 = vsub.s32 2, %v2262
    %v2264 = vrot.slane %v2177, %v2263
    %v2265 = vlaneseq
    %v2266 = vshrl.u32 %v2265, 7
    %v2267 = vsub.s32 3, %v2266
    %v2268 = vrot.slane %v2177, %v2267
    %v2274 = vlaneseq
    %v2275 = vshrl.u32 %v2274, 7
    %v2276 = vsub.s32 0, %v2275
    %v2277 = vrot.slane %v2182, %v2276
    %v2278 = vlaneseq
    %v2279 = vshrl.u32 %v2278, 7
    %v2280 = vsub.s32 1, %v2279
    %v2281 = vrot.slane %v2182, %v2280
    %v2282 = vlaneseq
    %v2283 = vshrl.u32 %v2282, 7
    %v2284 = vsub.s32 2, %v2283
    %v2285 = vrot.slane %v2182, %v2284
    %v2286 = vlaneseq
    %v2287 = vshrl.u32 %v2286, 7
    %v2288 = vsub.s32 3, %v2287
    %v2289 = vrot.slane %v2182, %v2288
    %v2295 = vlaneseq
    %v2296 = vshrl.u32 %v2295, 7
    %v2297 = vsub.s32 0, %v2296
    %v2298 = vrot.slane %v2188, %v2297
    %v2299 = vlaneseq
    %v2300 = vshrl.u32 %v2299, 7
    %v2301 = vsub.s32 1, %v2300
    %v2302 = vrot.slane %v2188, %v2301
    %v2303 = vlaneseq
    %v2304 = vshrl.u32 %v2303, 7
    %v2305 = vsub.s32 2, %v2304
    %v2306 = vrot.slane %v2188, %v2305
    %v2307 = vlaneseq
    %v2308 = vshrl.u32 %v2307, 7
    %v2309 = vsub.s32 3, %v2308
    %v2310 = vrot.slane %v2188, %v2309
    %vm2315 = vcmask 1040384
    %v2316 = vsel %vm2315, 1.0, %v2193
    %v2317 = vsel %vm2315, 1.0, %v2197
    %v2318 = vsel %vm2315, 1.0, %v2201
    %v2319 = vsel %vm2315, 1.0, %v2205
    %vm2320 = vcmask 1041408
    %v2321 = vsel %vm2320, %v2316, %v2214
    %v2322 = vsel %vm2320, %v2317, %v2218
    %v2323 = vsel %vm2320, %v2318, %v2222
    %v2324 = vsel %vm2320, %v2319, %v2226
    %vm2325 = vcmask 1042432
    %v2326 = vsel %vm2325, %v2321, %v2235
    %v2327 = vsel %vm2325, %v2322, %v2239
    %v2328 = vsel %vm2325, %v2323, %v2243
    %v2329 = vsel %vm2325, %v2324, %v2247
    %vm2330 = vcmask 1043456
    %v2331 = vsel %vm2330, %v2326, %v2256
    %v2332 = vsel %vm2330, %v2327, %v2260
    %v2333 = vsel %vm2330, %v2328, %v2264
    %v2334 = vsel %vm2330, %v2329, %v2268
    %vm2335 = vcmask 1044480
    %v2336 = vsel %vm2335, %v2331, %v2277
    %v2337 = vsel %vm2335, %v2332, %v2281
    %v2338 = vsel %vm2335, %v2333, %v2285
    %v2339 = vsel %vm2335, %v2334, %v2289
    %vm2340 = vcmask 1045504
    %v2341 = vsel %vm2340, %v2336, %v2298
    %v2342 = vsel %vm2340, %v2337, %v2302
    %v2343 = vsel %vm2340, %v2338, %v2306
    %v2344 = vsel %vm2340, %v2339, %v2310
    %vm2345 = vcmask 1046528
    %v2346 = vsel %vm2345, %v2341, 0.0
    %v2347 = vsel %vm2345, %v2342, 0.0
    %v2348 = vsel %vm2345, %v2343, 0.0
    %v2349 = vsel %vm2345, %v2344, 0.0
    %v2350 = vmul.f32 %v1896, %v2346
    %v2351 = vmul.f32 %v1898, %v2347
    %v2352 = vmul.f32 %v1967, %v2348
    %v2353 = vmul.f32 %v1969, %v2349
    %2354 = vst [vmem:[#allocation2] sm:$0xff] %v2350
    %2355 = vst [vmem:[#allocation2 + $0x8] sm:$0xff] %v2351
    %2356 = vst [vmem:[#allocation2 + $0x10] sm:$0xff] %v2352
    %2357 = vst [vmem:[#allocation2 + $0x18] sm:$0xff] %v2353
    // Predicated region
    $region42: #{tpu_custom_call.1} parent=1 // pred_check
      _
    $region43: #{tpu_custom_call.1} parent=1 // pred_check_branch
      %2359 = sbr.rel (0) target = $region45
    $region44: #{tpu_custom_call.1} parent=1 // pred_region
      %s2361 = ssub.s32 512, 512
      %2362 = vsyncadd [#allocation3], %s2361
      %s2364 = sshll.u32 [#allocation2], 4
      %s2365 = int_to_ptr.vmem [resolvable:$true] %s2364
      %2367 = dma.vmem_to_hbm [thread:$0]  %s2365, 512, %s10, [#allocation3]
    $region45: #{tpu_custom_call.1} parent=1 // pred_fallthru
      _
    // Predicated region
    $region46: #{tpu_custom_call.1} parent=1 // pred_check
      _
    $region47: #{tpu_custom_call.1} parent=1 // pred_check_branch
      %2369 = sbr.rel (0) target = $region49
    $region48: #{tpu_custom_call.1} parent=1 // pred_region
      %2370 = dma.done [#allocation3], 512
    $region49: #{tpu_custom_call.1} parent=1 // pred_fallthru
      _
    %2371 = vsyncpa [#allocation3], 1

</llo_original>
